<compile_context>
chip_gen: v7x
topology: tpu7x:2x2x1
jax: 0.10.0
libtpu: 0.0.40
codegen_flags: <defaults>
</compile_context>

<pallas_src>
import functools

import jax
import jax.numpy as jnp
from jax.experimental import pallas as pl
from jax.experimental.pallas import tpu as pltpu

_VMEM_LIMIT_BYTES = 32 * 1024 * 1024


# ----------------------------------------------------------------------------
# In-kernel helpers
# ----------------------------------------------------------------------------
def _im2col(xp, H, W, K):
    """xp: (Hp, Wp, C) padded tile -> (H*W, K*K*C); tap order (dy, dx) row-major."""
    C = xp.shape[-1]
    taps = [xp[dy:dy + H, dx:dx + W, :] for dy in range(K) for dx in range(K)]
    return jnp.concatenate(taps, axis=-1).reshape(H * W, K * K * C)


# ----------------------------------------------------------------------------
# Pallas kernels
# ----------------------------------------------------------------------------
def _conv_kernel(xp_ref, w_ref, b_ref, o_ref, *, H, W, K, relu):
    """KxK same-conv (pre-padded input) as a single MXU contraction, bias, opt ReLU."""
    cols = _im2col(xp_ref[0], H, W, K)                       # (H*W, K*K*Cin)
    acc = jnp.dot(cols, w_ref[...], preferred_element_type=jnp.float32)
    acc = acc + b_ref[...]
    if relu:
        acc = jnp.maximum(acc, 0.0)
    o_ref[0] = acc.reshape(H, W, -1).astype(o_ref.dtype)


def _resconv2_kernel(yp_ref, x_ref, w_ref, b_ref, o_ref, *, H, W, K):
    """Second resblock conv fused with residual add + ReLU epilogue."""
    cols = _im2col(yp_ref[0], H, W, K)
    acc = jnp.dot(cols, w_ref[...], preferred_element_type=jnp.float32) + b_ref[...]
    acc = acc.reshape(H, W, -1) + x_ref[0]
    o_ref[0] = jnp.maximum(acc, 0.0).astype(o_ref.dtype)


def _gru_gates_kernel(xp_ref, hp_ref, w_ref, b_ref, u_ref, rhp_ref, *, H, W, K, C):
    """ConvGRU update/reset gate conv fused with sigmoid + reset gating.

    Outputs: u = sigmoid(update_pre)           (1, H, W, C)
             rhp = zero-padded h*sigmoid(reset_pre)  (1, Hp, Wp, C)
    """
    p = K // 2
    colx = _im2col(xp_ref[0], H, W, K)
    colh = _im2col(hp_ref[0], H, W, K)
    cols = jnp.concatenate([colx, colh], axis=-1)            # (H*W, 2*K*K*C)
    pre = jnp.dot(cols, w_ref[...], preferred_element_type=jnp.float32) + b_ref[...]
    u = jax.nn.sigmoid(pre[:, :C]).reshape(H, W, C)
    r = jax.nn.sigmoid(pre[:, C:]).reshape(H, W, C)
    h = hp_ref[0, p:p + H, p:p + W, :]
    u_ref[0] = u.astype(u_ref.dtype)
    # Emit reset-gated hidden already zero-padded so the out-gate conv needs no pad.
    rhp_ref[...] = jnp.zeros(rhp_ref.shape, rhp_ref.dtype)
    rhp_ref[0, p:p + H, p:p + W, :] = (r * h).astype(rhp_ref.dtype)


def _gru_out_kernel(xp_ref, rhp_ref, hp_ref, u_ref, w_ref, b_ref, o_ref, *, H, W, K, C):
    """ConvGRU out-gate conv fused with the tanh/convex-combine epilogue."""
    p = K // 2
    colx = _im2col(xp_ref[0], H, W, K)
    colrh = _im2col(rhp_ref[0], H, W, K)
    cols = jnp.concatenate([colx, colrh], axis=-1)
    o_pre = jnp.dot(cols, w_ref[...], preferred_element_type=jnp.float32) + b_ref[...]
    o_pre = o_pre.reshape(H, W, C)
    u = u_ref[0]
    h = hp_ref[0, p:p + H, p:p + W, :]
    o_ref[0] = (h * (1.0 - u) + jnp.tanh(o_pre) * u).astype(o_ref.dtype)


def _pred_kernel(x_ref, w_ref, b_ref, o_ref):
    """1x1 conv to a single channel, written lane-dense as (H, W) (W on lanes)."""
    x = x_ref[0]                        # (H, W, C)
    w = w_ref[...]                      # (1, C)
    y = jnp.sum(x * w, axis=-1)         # (H, W)
    o_ref[0] = (y + b_ref[...]).astype(o_ref.dtype)


# ----------------------------------------------------------------------------
# pallas_call wrapper (grid over batch, batch axis parallel)
# ----------------------------------------------------------------------------
def _batched_pallas_call(kernel, out_shapes, args):
    """args: list of (array, batched).  Batched arrays are tiled (1, ...) over N."""
    N = next(a.shape[0] for a, batched in args if batched)

    in_specs = []
    for a, batched in args:
        nd = a.ndim
        if batched:
            in_specs.append(pl.BlockSpec((1,) + a.shape[1:],
                                         lambda n, nd=nd: (n,) + (0,) * (nd - 1)))
        else:
            in_specs.append(pl.BlockSpec(a.shape, lambda n, nd=nd: (0,) * nd))

    single = not isinstance(out_shapes, (tuple, list))
    out_list = [out_shapes] if single else list(out_shapes)
    out_specs = [pl.BlockSpec((1,) + s.shape[1:],
                              lambda n, nd=len(s.shape): (n,) + (0,) * (nd - 1))
                 for s in out_list]

    return pl.pallas_call(
        kernel,
        out_shape=out_list[0] if single else tuple(out_list),
        grid_spec=pltpu.PrefetchScalarGridSpec(
            num_scalar_prefetch=0,
            grid=(N,),
            in_specs=in_specs,
            out_specs=out_specs[0] if single else out_specs,
        ),
        compiler_params=pltpu.CompilerParams(
            dimension_semantics=("parallel",),
            vmem_limit_bytes=_VMEM_LIMIT_BYTES),
    )(*[a for a, _ in args])


def make_pallas_ops():
    def conv(xp, w, b, *, K, relu):
        N, Hp, Wp, _ = xp.shape
        H, W = Hp - (K - 1), Wp - (K - 1)
        Cout = w.shape[-1]
        kern = functools.partial(_conv_kernel, H=H, W=W, K=K, relu=relu)
        return _batched_pallas_call(
            kern, jax.ShapeDtypeStruct((N, H, W, Cout), jnp.float32),
            [(xp, True), (w, False), (b.reshape(1, -1), False)])

    def conv2_res(yp, x_res, w, b):
        N, Hp, Wp, C = yp.shape
        K = 3
        H, W = Hp - 2, Wp - 2
        kern = functools.partial(_resconv2_kernel, H=H, W=W, K=K)
        return _batched_pallas_call(
            kern, jax.ShapeDtypeStruct((N, H, W, C), jnp.float32),
            [(yp, True), (x_res, True), (w, False), (b.reshape(1, -1), False)])

    def gru_gates(xp, hp, w_ur, b_ur):
        N, Hp, Wp, C = xp.shape
        K = 3
        H, W = Hp - 2, Wp - 2
        kern = functools.partial(_gru_gates_kernel, H=H, W=W, K=K, C=C)
        out_shapes = (jax.ShapeDtypeStruct((N, H, W, C), jnp.float32),
                      jax.ShapeDtypeStruct((N, Hp, Wp, C), jnp.float32))
        return _batched_pallas_call(
            kern, out_shapes,
            [(xp, True), (hp, True), (w_ur, False), (b_ur.reshape(1, -1), False)])

    def gru_out(xp, rhp, hp, u, w_o, b_o):
        N, Hp, Wp, C = xp.shape
        K = 3
        H, W = Hp - 2, Wp - 2
        kern = functools.partial(_gru_out_kernel, H=H, W=W, K=K, C=C)
        return _batched_pallas_call(
            kern, jax.ShapeDtypeStruct((N, H, W, C), jnp.float32),
            [(xp, True), (rhp, True), (hp, True), (u, True),
             (w_o, False), (b_o.reshape(1, -1), False)])

    def pred(x, w, b):
        N, H, W, _ = x.shape
        return _batched_pallas_call(
            _pred_kernel, jax.ShapeDtypeStruct((N, H, W), jnp.float32),
            [(x, True), (w, False), (b, False)])

    return dict(conv=conv, conv2_res=conv2_res, gru_gates=gru_gates,
                gru_out=gru_out, pred=pred)


# ----------------------------------------------------------------------------
# Pure-JAX reference ops (same interface; verifies the Pallas path)
# ----------------------------------------------------------------------------
def make_ref_ops():
    def _cols(xp, K):
        N, Hp, Wp, _ = xp.shape
        H, W = Hp - (K - 1), Wp - (K - 1)
        taps = [xp[:, dy:dy + H, dx:dx + W, :] for dy in range(K) for dx in range(K)]
        return jnp.concatenate(taps, axis=-1)

    def conv(xp, w, b, *, K, relu):
        acc = jnp.einsum('nhwk,ko->nhwo', _cols(xp, K), w) + b
        return jnp.maximum(acc, 0.0) if relu else acc

    def conv2_res(yp, x_res, w, b):
        acc = jnp.einsum('nhwk,ko->nhwo', _cols(yp, 3), w) + b + x_res
        return jnp.maximum(acc, 0.0)

    def gru_gates(xp, hp, w_ur, b_ur):
        C = xp.shape[-1]
        cols = jnp.concatenate([_cols(xp, 3), _cols(hp, 3)], axis=-1)
        pre = jnp.einsum('nhwk,ko->nhwo', cols, w_ur) + b_ur
        u = jax.nn.sigmoid(pre[..., :C])
        r = jax.nn.sigmoid(pre[..., C:])
        h = hp[:, 1:-1, 1:-1, :]
        rhp = jnp.pad(r * h, ((0, 0), (1, 1), (1, 1), (0, 0)))
        return u, rhp

    def gru_out(xp, rhp, hp, u, w_o, b_o):
        C = xp.shape[-1]
        cols = jnp.concatenate([_cols(xp, 3), _cols(rhp, 3)], axis=-1)
        o_pre = jnp.einsum('nhwk,ko->nhwo', cols, w_o) + b_o
        h = hp[:, 1:-1, 1:-1, :]
        return h * (1.0 - u) + jnp.tanh(o_pre) * u

    def pred(x, w, b):
        return jnp.einsum('nhwc,c->nhw', x, w[0]) + b[0, 0]

    return dict(conv=conv, conv2_res=conv2_res, gru_gates=gru_gates,
                gru_out=gru_out, pred=pred)


# ----------------------------------------------------------------------------
# Model blocks (NHWC)
# ----------------------------------------------------------------------------
def _pad_same(x, p):
    return jnp.pad(x, ((0, 0), (p, p), (p, p), (0, 0)))


def conv_gru(x, h, p_gru, ops):
    """ConvGRU with 3x3 gates (update/reset conv + out conv), matching PyTorch ConvGRU."""
    xp = _pad_same(x, 1)
    hp = _pad_same(h, 1)
    u, rhp = ops['gru_gates'](xp, hp, p_gru['w_ur'], p_gru['b_ur'])
    return ops['gru_out'](xp, rhp, hp, u, p_gru['w_o'], p_gru['b_o'])


def residual_block(x, p, ops):
    xp = _pad_same(x, 1)
    y = ops['conv'](xp, p['w1'], p['b1'], K=3, relu=True)
    yp = _pad_same(y, 1)
    return ops['conv2_res'](yp, x, p['w2'], p['b2'])


# ----------------------------------------------------------------------------
# Parameter init (deterministic, synthetic; flattened-contraction weight layout)
# ----------------------------------------------------------------------------
def _conv_w(key, K, cin, cout):
    scale = 1.0 / jnp.sqrt(jnp.float32(cin * K * K))
    return jax.random.normal(key, (K * K * cin, cout), jnp.float32) * scale


def _gru_params(keys, C):
    # Stacked contraction layout: rows = [x taps | h taps], cols = [update | reset].
    wx_u, wh_u = _conv_w(keys[0], 3, C, C), _conv_w(keys[1], 3, C, C)
    wx_r, wh_r = _conv_w(keys[2], 3, C, C), _conv_w(keys[3], 3, C, C)
    w_ur = jnp.concatenate(
        [jnp.concatenate([wx_u, wx_r], axis=-1),
         jnp.concatenate([wh_u, wh_r], axis=-1)], axis=0)        # (2*9*C, 2C)
    wx_o, wh_o = _conv_w(keys[4], 3, C, C), _conv_w(keys[5], 3, C, C)
    w_o = jnp.concatenate([wx_o, wh_o], axis=0)                   # (2*9*C, C)
    return dict(w_ur=w_ur, b_ur=jnp.zeros((2 * C,), jnp.float32),
                w_o=w_o, b_o=jnp.zeros((C,), jnp.float32))


def init_firenet_params(key, config):
    num_bins = int(config['num_bins'])
    C = int(config.get('base_num_channels', 32))
    K = int(config.get('kernel_size', 3))
    n_res = int(config.get('num_residual_blocks', 2))
    rec_idx = config.get('recurrent_blocks', {'resblock': [0]}).get('resblock', [])

    n_keys = 8 + 8 * n_res
    keys = jax.random.split(key, n_keys)
    ki = iter(range(n_keys))
    nk = lambda: keys[next(ki)]

    params = {}
    params['head_conv'] = dict(w=_conv_w(nk(), K, num_bins, C),
                               b=jnp.zeros((C,), jnp.float32))
    params['head_gru'] = _gru_params([nk() for _ in range(6)], C)

    resblocks = []
    for i in range(n_res):
        rp = dict(w1=_conv_w(nk(), 3, C, C), b1=jnp.zeros((C,), jnp.float32),
                  w2=_conv_w(nk(), 3, C, C), b2=jnp.zeros((C,), jnp.float32))
        rp['recurrent'] = (i in rec_idx) or (-1 in rec_idx)
        if rp['recurrent']:
            rp['gru'] = _gru_params([nk() for _ in range(6)], C)
        resblocks.append(rp)
    params['resblocks'] = resblocks

    # pred: 1x1 conv to 1 channel, bias filled with 0.5 (as in UNetFire.__init__)
    params['pred'] = dict(w=_conv_w(nk(), 1, C, 1).reshape(1, C),
                          b=jnp.full((1, 1), 0.5, jnp.float32))

    params['_meta'] = dict(
        kernel_size=K, base=C,
        num_recurrent_units=1 + sum(r['recurrent'] for r in resblocks))
    return params


# ----------------------------------------------------------------------------
# FireNet_legacy forward
# ----------------------------------------------------------------------------
def firenet_forward(params, event_tensor_nchw, prev_states, ops):
    """event_tensor_nchw: (N, num_bins, H, W).  Returns (img NCHW, new NHWC states)."""
    meta = params['_meta']
    K, C = meta['kernel_size'], meta['base']
    if prev_states is None:
        prev_states = [None] * meta['num_recurrent_units']

    x = jnp.transpose(event_tensor_nchw, (0, 2, 3, 1)).astype(jnp.float32)  # -> NHWC
    N, H, W_, _ = x.shape

    states = []
    si = 0

    # head: ConvLayer (KxK, ReLU) + ConvGRU
    xp = _pad_same(x, K // 2)
    x = ops['conv'](xp, params['head_conv']['w'], params['head_conv']['b'],
                    K=K, relu=True)
    h = prev_states[si]
    if h is None:
        h = jnp.zeros((N, H, W_, C), jnp.float32)
    x = conv_gru(x, h, params['head_gru'], ops)
    states.append(x)
    si += 1

    # residual blocks (resblock 0 recurrent, resblock 1 plain by default)
    for rp in params['resblocks']:
        x = residual_block(x, rp, ops)
        if rp['recurrent']:
            h = prev_states[si]
            if h is None:
                h = jnp.zeros((N, H, W_, C), jnp.float32)
            x = conv_gru(x, h, rp['gru'], ops)
            states.append(x)
            si += 1

    # pred: 1x1 conv (bias 0.5), lane-dense (N, H, W) output -> NCHW
    img = ops['pred'](x, params['pred']['w'], params['pred']['b'])
    img = img[:, None, :, :]  # (N, 1, H, W)
    return img, states


# ----------------------------------------------------------------------------
# Demo / self-check
# ----------------------------------------------------------------------------
if __name__ == "__main__":
    key = jax.random.PRNGKey(0)
    kp, kx = jax.random.split(key)

    config = {
        'num_bins': 4,
        'base_num_channels': 16,
        'kernel_size': 3,
        'num_residual_blocks': 2,
        'recurrent_blocks': {'resblock': [0]},
    }
    params = init_firenet_params(kp, config)

    # PyTorch-style NCHW event tensor: N x num_bins x H x W
    x = jax.random.normal(kx, (2, config['num_bins'], 16, 16), jnp.float32)

    pallas_ops = make_pallas_ops()
    ref_ops = make_ref_ops()

    n_rec = params['_meta']['num_recurrent_units']
    states_p = [None] * n_rec
    states_r = [None] * n_rec

    # Run two timesteps so the recurrent (ConvGRU) state path is exercised.
    for _ in range(2):
        img_p, states_p = firenet_forward(params, x, states_p, pallas_ops)
        img_r, states_r = firenet_forward(params, x, states_r, ref_ops)

    img_p = jax.block_until_ready(img_p)
    img_r = jax.block_until_ready(img_r)

    assert img_p.shape == (2, 1, 16, 16), img_p.shape
    if not jnp.allclose(img_p, img_r, atol=1e-3, rtol=1e-3):
        max_err = float(jnp.max(jnp.abs(img_p - img_r)))
        raise AssertionError(f"Pallas output mismatch vs reference (max abs err {max_err})")

    print("KERNEL_OK")
</pallas_src>

<mosaic_0001>
module attributes {stable_mosaic.version = 11 : i64} {
  func.func @_conv_kernel(%arg0: i32, %arg1: memref<1x18x18x4xf32, #tpu.memory_space<vmem>>, %arg2: memref<36x16xf32, #tpu.memory_space<vmem>>, %arg3: memref<1x16xf32, #tpu.memory_space<vmem>>, %arg4: memref<1x16x16x16xf32, #tpu.memory_space<vmem>>) attributes {dimension_semantics = [#tpu.dimension_semantics<parallel>], iteration_bounds = array<i64: 2>, scalar_prefetch = 0 : i64, scratch_operands = 0 : i64, tpu.core_type = #tpu.core_type<tc>, window_params = [{transform_indices = @transform_0, window_bounds = array<i64: 1, 18, 18, 4>}, {pipeline_mode = #tpu.pipeline_mode<synchronous>, transform_indices = @transform_1, window_bounds = array<i64: 36, 16>}, {pipeline_mode = #tpu.pipeline_mode<synchronous>, transform_indices = @transform_2, window_bounds = array<i64: 1, 16>}, {transform_indices = @transform_3, window_bounds = array<i64: 1, 16, 16, 16>}]} {
    %c0 = arith.constant 0 : index
    %c0_0 = arith.constant 0 : index
    %c0_1 = arith.constant 0 : index
    %c0_2 = arith.constant 0 : index
    %0 = vector.load %arg1[%c0, %c0_0, %c0_1, %c0_2] : memref<1x18x18x4xf32, #tpu.memory_space<vmem>>, vector<1x18x18x4xf32>
    %1 = vector.shape_cast %0 : vector<1x18x18x4xf32> to vector<18x18x4xf32>
    %2 = vector.extract_strided_slice %1 {offsets = [0, 0, 0], sizes = [16, 16, 4], strides = [1, 1, 1]} : vector<18x18x4xf32> to vector<16x16x4xf32>
    %3 = vector.extract_strided_slice %1 {offsets = [0, 1, 0], sizes = [16, 16, 4], strides = [1, 1, 1]} : vector<18x18x4xf32> to vector<16x16x4xf32>
    %4 = vector.extract_strided_slice %1 {offsets = [0, 2, 0], sizes = [16, 16, 4], strides = [1, 1, 1]} : vector<18x18x4xf32> to vector<16x16x4xf32>
    %5 = vector.extract_strided_slice %1 {offsets = [1, 0, 0], sizes = [16, 16, 4], strides = [1, 1, 1]} : vector<18x18x4xf32> to vector<16x16x4xf32>
    %6 = vector.extract_strided_slice %1 {offsets = [1, 1, 0], sizes = [16, 16, 4], strides = [1, 1, 1]} : vector<18x18x4xf32> to vector<16x16x4xf32>
    %7 = vector.extract_strided_slice %1 {offsets = [1, 2, 0], sizes = [16, 16, 4], strides = [1, 1, 1]} : vector<18x18x4xf32> to vector<16x16x4xf32>
    %8 = vector.extract_strided_slice %1 {offsets = [2, 0, 0], sizes = [16, 16, 4], strides = [1, 1, 1]} : vector<18x18x4xf32> to vector<16x16x4xf32>
    %9 = vector.extract_strided_slice %1 {offsets = [2, 1, 0], sizes = [16, 16, 4], strides = [1, 1, 1]} : vector<18x18x4xf32> to vector<16x16x4xf32>
    %10 = vector.extract_strided_slice %1 {offsets = [2, 2, 0], sizes = [16, 16, 4], strides = [1, 1, 1]} : vector<18x18x4xf32> to vector<16x16x4xf32>
    %11 = tpu.concatenate %2, %3, %4, %5, %6, %7, %8, %9, %10 in 2 : vector<16x16x4xf32>, vector<16x16x4xf32>, vector<16x16x4xf32>, vector<16x16x4xf32>, vector<16x16x4xf32>, vector<16x16x4xf32>, vector<16x16x4xf32>, vector<16x16x4xf32>, vector<16x16x4xf32> -> vector<16x16x36xf32>
    %12 = vector.shape_cast %11 : vector<16x16x36xf32> to vector<256x36xf32>
    %c0_3 = arith.constant 0 : index
    %c0_4 = arith.constant 0 : index
    %13 = vector.load %arg2[%c0_3, %c0_4] : memref<36x16xf32, #tpu.memory_space<vmem>>, vector<36x16xf32>
    %cst = arith.constant dense<0.000000e+00> : vector<256x16xf32>
    %14 = tpu.matmul %12, %13, %cst {dimension_numbers = #tpu.dot_dimension_numbers<[1], [0], [0], [1], [0, 0, 1, 1], [], []>} : vector<256x36xf32>, vector<36x16xf32>, vector<256x16xf32> -> vector<256x16xf32>
    %c0_5 = arith.constant 0 : index
    %c0_6 = arith.constant 0 : index
    %15 = vector.load %arg3[%c0_5, %c0_6] : memref<1x16xf32, #tpu.memory_space<vmem>>, vector<1x16xf32>
    %16 = vector.broadcast %15 : vector<1x16xf32> to vector<256x16xf32>
    %17 = arith.addf %14, %16 : vector<256x16xf32>
    %cst_7 = arith.constant 0.000000e+00 : f32
    %18 = vector.broadcast %cst_7 : f32 to vector<256x16xf32>
    %19 = arith.maximumf %17, %18 : vector<256x16xf32>
    %20 = vector.shape_cast %19 : vector<256x16xf32> to vector<16x16x16xf32>
    %c0_8 = arith.constant 0 : index
    %c0_9 = arith.constant 0 : index
    %c0_10 = arith.constant 0 : index
    %c0_11 = arith.constant 0 : index
    %21 = vector.load %arg4[%c0_8, %c0_9, %c0_10, %c0_11] : memref<1x16x16x16xf32, #tpu.memory_space<vmem>>, vector<1x16x16x16xf32>
    %22 = vector.shape_cast %21 : vector<1x16x16x16xf32> to vector<16x16x16xf32>
    %23 = vector.shape_cast %20 : vector<16x16x16xf32> to vector<1x16x16x16xf32>
    tpu.vector_store %arg4[%c0_8, %c0_9, %c0_10, %c0_11], %23 {strides = array<i32>} : memref<1x16x16x16xf32, #tpu.memory_space<vmem>>, vector<1x16x16x16xf32>,
    return
  }
  func.func @transform_0(%arg0: i32) -> (i32, i32, i32, i32) {
    %c0_i32 = arith.constant 0 : i32
    %c0_i32_0 = arith.constant 0 : i32
    %c0_i32_1 = arith.constant 0 : i32
    %c0_i32_2 = arith.constant 0 : i32
    return %arg0, %c0_i32, %c0_i32_0, %c0_i32_1 : i32, i32, i32, i32
  }
  func.func @transform_1(%arg0: i32) -> (i32, i32) {
    %c0_i32 = arith.constant 0 : i32
    %c0_i32_0 = arith.constant 0 : i32
    %c0_i32_1 = arith.constant 0 : i32
    return %c0_i32, %c0_i32_0 : i32, i32
  }
  func.func @transform_2(%arg0: i32) -> (i32, i32) {
    %c0_i32 = arith.constant 0 : i32
    %c0_i32_0 = arith.constant 0 : i32
    %c0_i32_1 = arith.constant 0 : i32
    return %c0_i32, %c0_i32_0 : i32, i32
  }
  func.func @transform_3(%arg0: i32) -> (i32, i32, i32, i32) {
    %c0_i32 = arith.constant 0 : i32
    %c0_i32_0 = arith.constant 0 : i32
    %c0_i32_1 = arith.constant 0 : i32
    %c0_i32_2 = arith.constant 0 : i32
    return %arg0, %c0_i32, %c0_i32_0, %c0_i32_1 : i32, i32, i32, i32
  }
}

</mosaic_0001>

<llo_original>
// kernel: tpu_custom_call.1
$region0: #{tpu_custom_call.1}
  #allocation0 [shape = 'u32[]', space=smem, size = 0x4, offset = 0x4, fixed_abs, tag = 'smem constant byte address 0x4 - core index']
  #allocation1 [shape = 'u32[144,128]{1,0:T(1,128)}', space=vmem, size = 0x12000, scoped, tag = 'internal scratch']
  %s0 = inlined_call_operand.vmem [shape: f32[2,18,18,4], index: 0, kind: input, shape index: {}]
  %s1 = inlined_call_operand.vmem [shape: f32[36,16], index: 1, kind: input, shape index: {}]
  %s2 = inlined_call_operand.vmem [shape: f32[1,16], index: 2, kind: input, shape index: {}]
  %s3 = inlined_call_operand.hbm [shape: f32[2,16,16,16], index: 3, kind: output, shape index: {}]
  %s4 = sld [smem:[#allocation0]]
  $region45: #{tpu_custom_call.1} parent=0
    _
  %s6 = ssub.s32 1, %s4
  %s7 = scalar_select 0, %s6, %s4
  $region1: #{tpu_custom_call.1} parent=0
    #allocation2 [shape = 'u8[262144]{0}', space=vmem, size = 0x40000, scoped, tag = 'output window, operand 0']
    #allocation3 [shape = 's32[2]{0}', space=sflag, size = 0x8, scoped, tag = 'scoped memory for tpu_custom_call.1']
    %8 = vsyncpa [#allocation3], 0
    %s9 = scalar_lea.sflag [#allocation3], 1
    %10 = vsyncpa %s9, 0
    loop: start=0, step=1, limit=4
    $region2: #{tpu_custom_call.1} parent=1 // loop_pre_header
      _
    $region3: #{tpu_custom_call.1} parent=1 // loop_header
      %s12 = sphi 0, %s16
      %p13 = scmp.ge.s32.totalorder %s12, 4
      %s22 = sphi 0, %s24
      %s25 = sphi 0, %s22
      %s26 = sphi 0, %s25
      %s42 = sphi 0, %s26
      %s46 = sphi 0, %s46
      %s48 = sphi 0, %s46
      %s49 = sphi 0, %s48
      %s63 = sphi 0, %s49
      %s67 = sphi 0, %s67
      %s69 = sphi 0, %s67
      %s70 = sphi 0, %s69
      %s84 = sphi 0, %s70
      %s90 = sphi 0, %s92
      %s93 = sphi 0, %s90
      %s94 = sphi 0, %s93
      %s110 = sphi 0, %s94
    $region4: #{tpu_custom_call.1} parent=1 // loop_header_branch
      %15 = sbr.rel (%p13) target = $region8
    $region5: #{tpu_custom_call.1} parent=1 // loop_body
      %s17 = ssub.s32 %s12, 1
      %s18 = ssub.s32 %s12, 2
      %s19 = sadd.s32 %s12, 1
      %s20 = ssub.s32 %s12, %s19
      %p21 = scmp.eq.s32.totalorder %s20, 0
      %s23 = sadd.s32 %s22, 1
      %s24 = scalar_select %p21, %s22, %s23
      %p27 = pneg %p21
      %p28 = scmp.eq.s32.totalorder %s12, 1
      %p29 = por %p27, %p28
      %p30 = scmp.ne.s32.totalorder %s22, %s25
      %p31 = scmp.eq.s32.totalorder %s12, 0
      %p32 = por %p30, %p31
      %p33 = scmp.ne.s32.totalorder %s22, %s25
      %p34 = scmp.eq.s32.totalorder %s17, 1
      %p35 = por %p33, %p34
      %p36 = scmp.ne.s32.totalorder %s25, %s26
      %p37 = scmp.eq.s32.totalorder %s17, 0
      %p38 = por %p36, %p37
      %p39 = scmp.ne.s32.totalorder %s25, %s26
      %p40 = scmp.eq.s32.totalorder %s18, 1
      %p41 = por %p39, %p40
      %p43 = scmp.ne.s32.totalorder %s26, %s42
      %p44 = scmp.eq.s32.totalorder %s18, 0
      %p45 = por %p43, %p44
      %s47 = sadd.s32 %s46, 1
      %p50 = scmp.eq.s32.totalorder %s12, 1
      %p51 = scmp.ne.s32.totalorder %s46, %s48
      %p52 = scmp.eq.s32.totalorder %s12, 0
      %p53 = por %p51, %p52
      %p54 = scmp.ne.s32.totalorder %s46, %s48
      %p55 = scmp.eq.s32.totalorder %s17, 1
      %p56 = por %p54, %p55
      %p57 = scmp.ne.s32.totalorder %s48, %s49
      %p58 = scmp.eq.s32.totalorder %s17, 0
      %p59 = por %p57, %p58
      %p60 = scmp.ne.s32.totalorder %s48, %s49
      %p61 = scmp.eq.s32.totalorder %s18, 1
      %p62 = por %p60, %p61
      %p64 = scmp.ne.s32.totalorder %s49, %s63
      %p65 = scmp.eq.s32.totalorder %s18, 0
      %p66 = por %p64, %p65
      %s68 = sadd.s32 %s67, 1
      %p71 = scmp.eq.s32.totalorder %s12, 1
      %p72 = scmp.ne.s32.totalorder %s67, %s69
      %p73 = scmp.eq.s32.totalorder %s12, 0
      %p74 = por %p72, %p73
      %p75 = scmp.ne.s32.totalorder %s67, %s69
      %p76 = scmp.eq.s32.totalorder %s17, 1
      %p77 = por %p75, %p76
      %p78 = scmp.ne.s32.totalorder %s69, %s70
      %p79 = scmp.eq.s32.totalorder %s17, 0
      %p80 = por %p78, %p79
      %p81 = scmp.ne.s32.totalorder %s69, %s70
      %p82 = scmp.eq.s32.totalorder %s18, 1
      %p83 = por %p81, %p82
      %p85 = scmp.ne.s32.totalorder %s70, %s84
      %p86 = scmp.eq.s32.totalorder %s18, 0
      %p87 = por %p85, %p86
      %s88 = ssub.s32 %s12, %s19
      %p89 = scmp.eq.s32.totalorder %s88, 0
      %s91 = sadd.s32 %s90, 1
      %s92 = scalar_select %p89, %s90, %s91
      %p95 = pneg %p89
      %p96 = scmp.eq.s32.totalorder %s12, 1
      %p97 = por %p95, %p96
      %p98 = scmp.ne.s32.totalorder %s90, %s93
      %p99 = scmp.eq.s32.totalorder %s12, 0
      %p100 = por %p98, %p99
      %p101 = scmp.ne.s32.totalorder %s90, %s93
      %p102 = scmp.eq.s32.totalorder %s17, 1
      %p103 = por %p101, %p102
      %p104 = scmp.ne.s32.totalorder %s93, %s94
      %p105 = scmp.eq.s32.totalorder %s17, 0
      %p106 = por %p104, %p105
      %p107 = scmp.ne.s32.totalorder %s93, %s94
      %p108 = scmp.eq.s32.totalorder %s18, 1
      %p109 = por %p107, %p108
      %p111 = scmp.ne.s32.totalorder %s94, %s110
      %p112 = scmp.eq.s32.totalorder %s18, 0
      %p113 = por %p111, %p112
      %p114 = scmp.le.s32.totalorder 1, %s12
      %p115 = scmp.lt.s32.totalorder %s12, 3
      %p116 = pnand %p114, %p115
      %p117 = pneg %p116
      // Predicated region
      $region9: #{tpu_custom_call.1} parent=5 // pred_check
        _
      $region10: #{tpu_custom_call.1} parent=5 // pred_check_branch
        %119 = sbr.rel (%p116) target = $region12
      $region11: #{tpu_custom_call.1} parent=5 // pred_region
        %s120 = ssub.s32 %s12, 1
        // Predicated region
        $region13: #{tpu_custom_call.1} parent=11 // pred_check
          %p121 = pneg %p59
        $region14: #{tpu_custom_call.1} parent=11 // pred_check_branch
          %123 = sbr.rel (%p121) target = $region16
        $region15: #{tpu_custom_call.1} parent=11 // pred_region
          _
        $region16: #{tpu_custom_call.1} parent=11 // pred_fallthru
          _
        // Predicated region
        $region17: #{tpu_custom_call.1} parent=11 // pred_check
          %p124 = pneg %p80
        $region18: #{tpu_custom_call.1} parent=11 // pred_check_branch
          %126 = sbr.rel (%p124) target = $region20
        $region19: #{tpu_custom_call.1} parent=11 // pred_region
          _
        $region20: #{tpu_custom_call.1} parent=11 // pred_fallthru
          _
      $region12: #{tpu_custom_call.1} parent=5 // pred_fallthru
        _
      %p127 = scmp.lt.s32.totalorder %s12, 2
      // Predicated region
      $region21: #{tpu_custom_call.1} parent=5 // pred_check
        %p128 = pneg %p127
      $region22: #{tpu_custom_call.1} parent=5 // pred_check_branch
        %130 = sbr.rel (%p128) target = $region24
      $region23: #{tpu_custom_call.1} parent=5 // pred_region
        // Predicated region
        $region25: #{tpu_custom_call.1} parent=23 // pred_check
          %p131 = pneg %p32
        $region26: #{tpu_custom_call.1} parent=23 // pred_check_branch
          %133 = sbr.rel (%p131) target = $region28
        $region27: #{tpu_custom_call.1} parent=23 // pred_region
          %p134 = scmp.lt.s32.totalorder %s12, 1
          %s135 = scalar_select %p134, %s12, 1
          %s136 = smul.addr %s135, 54
          %s137 = smul.addr %s136, 8
          %s138 = scalar_lea.vmem %s0, %s137
        $region28: #{tpu_custom_call.1} parent=23 // pred_fallthru
          _
      $region24: #{tpu_custom_call.1} parent=5 // pred_fallthru
        _
      %p139 = scmp.le.s32.totalorder 1, %s12
      %p140 = scmp.lt.s32.totalorder %s12, 3
      %p141 = pnand %p139, %p140
      %p142 = pneg %p141
      // Predicated region
      $region29: #{tpu_custom_call.1} parent=5 // pred_check
        _
      $region30: #{tpu_custom_call.1} parent=5 // pred_check_branch
        %144 = sbr.rel (%p141) target = $region32
      $region31: #{tpu_custom_call.1} parent=5 // pred_region
        %s145 = ssub.s32 %s12, 1
        %p146 = scmp.lt.s32.totalorder %s17, 1
        %s147 = scalar_select %p146, %s17, 1
        %s148 = smul.addr %s147, 54
        %s149 = smul.addr %s148, 8
        %s150 = scalar_lea.vmem %s0, %s149
        %p151 = pneg %p38
        %p152 = pneg %p35
        %p153 = pneg %p59
        %p154 = pneg %p56
        %p155 = pneg %p80
        %p156 = pneg %p77
        %p157 = pneg %p106
        %p158 = pneg %p103
        %s159 = sand.u32 %s93, 1
        %s160 = scalar_lea.sflag [#allocation3], %s159
        %s161 = sand.u32 %s93, 1
        %s162 = smul.addr %s161, 256
        %s163 = scalar_lea.vmem [#allocation2], %s162
        %p164 = scmp.lt.s32.totalorder %s17, 1
        %s165 = scalar_select %p164, %s17, 1
        %s166 = smul.addr %s165, 54
        %s167 = smul.addr %s166, 8
        %s168 = scalar_lea.vmem %s0, %s167
        %v169 = vld [vmem:[%s168] sm:$0xff]
        %v170 = vld [vmem:[%s168 + $0x8] sm:$0xff]
        %v171 = vld [vmem:[%s168 + $0x10] sm:$0x3]
        %v172 = vld [vmem:[%s168 + $0x18] sm:$0xff]
        %v173 = vld [vmem:[%s168 + $0x20] sm:$0xff]
        %v174 = vld [vmem:[%s168 + $0x28] sm:$0x3]
        %v175 = vld [vmem:[%s168 + $0x30] sm:$0xff]
        %v176 = vld [vmem:[%s168 + $0x38] sm:$0xff]
        %v177 = vld [vmem:[%s168 + $0x40] sm:$0x3]
        %v178 = vld [vmem:[%s168 + $0x48] sm:$0xff]
        %v179 = vld [vmem:[%s168 + $0x50] sm:$0xff]
        %v180 = vld [vmem:[%s168 + $0x58] sm:$0x3]
        %v181 = vld [vmem:[%s168 + $0x60] sm:$0xff]
        %v182 = vld [vmem:[%s168 + $0x68] sm:$0xff]
        %v183 = vld [vmem:[%s168 + $0x70] sm:$0x3]
        %v184 = vld [vmem:[%s168 + $0x78] sm:$0xff]
        %v185 = vld [vmem:[%s168 + $0x80] sm:$0xff]
        %v186 = vld [vmem:[%s168 + $0x88] sm:$0x3]
        %v187 = vld [vmem:[%s168 + $0x90] sm:$0xff]
        %v188 = vld [vmem:[%s168 + $0x98] sm:$0xff]
        %v189 = vld [vmem:[%s168 + $0xa0] sm:$0x3]
        %v190 = vld [vmem:[%s168 + $0xa8] sm:$0xff]
        %v191 = vld [vmem:[%s168 + $0xb0] sm:$0xff]
        %v192 = vld [vmem:[%s168 + $0xb8] sm:$0x3]
        %v193 = vld [vmem:[%s168 + $0xc0] sm:$0xff]
        %v194 = vld [vmem:[%s168 + $0xc8] sm:$0xff]
        %v195 = vld [vmem:[%s168 + $0xd0] sm:$0x3]
        %v196 = vld [vmem:[%s168 + $0xd8] sm:$0xff]
        %v197 = vld [vmem:[%s168 + $0xe0] sm:$0xff]
        %v198 = vld [vmem:[%s168 + $0xe8] sm:$0x3]
        %v199 = vld [vmem:[%s168 + $0xf0] sm:$0xff]
        %v200 = vld [vmem:[%s168 + $0xf8] sm:$0xff]
        %v201 = vld [vmem:[%s168 + $0x100] sm:$0x3]
        %v202 = vld [vmem:[%s168 + $0x108] sm:$0xff]
        %v203 = vld [vmem:[%s168 + $0x110] sm:$0xff]
        %v204 = vld [vmem:[%s168 + $0x118] sm:$0x3]
        %v205 = vld [vmem:[%s168 + $0x120] sm:$0xff]
        %v206 = vld [vmem:[%s168 + $0x128] sm:$0xff]
        %v207 = vld [vmem:[%s168 + $0x130] sm:$0x3]
        %v208 = vld [vmem:[%s168 + $0x138] sm:$0xff]
        %v209 = vld [vmem:[%s168 + $0x140] sm:$0xff]
        %v210 = vld [vmem:[%s168 + $0x148] sm:$0x3]
        %v211 = vld [vmem:[%s168 + $0x150] sm:$0xff]
        %v212 = vld [vmem:[%s168 + $0x158] sm:$0xff]
        %v213 = vld [vmem:[%s168 + $0x160] sm:$0x3]
        %v214 = vld [vmem:[%s168 + $0x168] sm:$0xff]
        %v215 = vld [vmem:[%s168 + $0x170] sm:$0xff]
        %v216 = vld [vmem:[%s168 + $0x178] sm:$0x3]
        %v217 = vld [vmem:[%s168 + $0x180] sm:$0xff]
        %v218 = vld [vmem:[%s168 + $0x188] sm:$0xff]
        %v219 = vld [vmem:[%s168 + $0x190] sm:$0x3]
        %v220 = vld [vmem:[%s168 + $0x198] sm:$0xff]
        %v221 = vld [vmem:[%s168 + $0x1a0] sm:$0xff]
        %v222 = vld [vmem:[%s168 + $0x1a8] sm:$0x3]
        %vm271 = vcmask 1046528
        %v272 = vrot.slane %v169, 1
        %v273 = vrot.slane %v170, 1
        %v274 = vsel %vm271, %v272, %v273
        %v275 = vrot.slane %v171, 1
        %v276 = vsel %vm271, %v273, %v275
        %v277 = vrot.slane %v172, 1
        %v278 = vrot.slane %v173, 1
        %v279 = vsel %vm271, %v277, %v278
        %v280 = vrot.slane %v174, 1
        %v281 = vsel %vm271, %v278, %v280
        %v282 = vrot.slane %v175, 1
        %v283 = vrot.slane %v176, 1
        %v284 = vsel %vm271, %v282, %v283
        %v285 = vrot.slane %v177, 1
        %v286 = vsel %vm271, %v283, %v285
        %v287 = vrot.slane %v178, 1
        %v288 = vrot.slane %v179, 1
        %v289 = vsel %vm271, %v287, %v288
        %v290 = vrot.slane %v180, 1
        %v291 = vsel %vm271, %v288, %v290
        %v292 = vrot.slane %v181, 1
        %v293 = vrot.slane %v182, 1
        %v294 = vsel %vm271, %v292, %v293
        %v295 = vrot.slane %v183, 1
        %v296 = vsel %vm271, %v293, %v295
        %v297 = vrot.slane %v184, 1
        %v298 = vrot.slane %v185, 1
        %v299 = vsel %vm271, %v297, %v298
        %v300 = vrot.slane %v186, 1
        %v301 = vsel %vm271, %v298, %v300
        %v302 = vrot.slane %v187, 1
        %v303 = vrot.slane %v188, 1
        %v304 = vsel %vm271, %v302, %v303
        %v305 = vrot.slane %v189, 1
        %v306 = vsel %vm271, %v303, %v305
        %v307 = vrot.slane %v190, 1
        %v308 = vrot.slane %v191, 1
        %v309 = vsel %vm271, %v307, %v308
        %v310 = vrot.slane %v192, 1
        %v311 = vsel %vm271, %v308, %v310
        %v312 = vrot.slane %v193, 1
        %v313 = vrot.slane %v194, 1
        %v314 = vsel %vm271, %v312, %v313
        %v315 = vrot.slane %v195, 1
        %v316 = vsel %vm271, %v313, %v315
        %v317 = vrot.slane %v196, 1
        %v318 = vrot.slane %v197, 1
        %v319 = vsel %vm271, %v317, %v318
        %v320 = vrot.slane %v198, 1
        %v321 = vsel %vm271, %v318, %v320
        %v322 = vrot.slane %v199, 1
        %v323 = vrot.slane %v200, 1
        %v324 = vsel %vm271, %v322, %v323
        %v325 = vrot.slane %v201, 1
        %v326 = vsel %vm271, %v323, %v325
        %v327 = vrot.slane %v202, 1
        %v328 = vrot.slane %v203, 1
        %v329 = vsel %vm271, %v327, %v328
        %v330 = vrot.slane %v204, 1
        %v331 = vsel %vm271, %v328, %v330
        %v332 = vrot.slane %v205, 1
        %v333 = vrot.slane %v206, 1
        %v334 = vsel %vm271, %v332, %v333
        %v335 = vrot.slane %v207, 1
        %v336 = vsel %vm271, %v333, %v335
        %v337 = vrot.slane %v208, 1
        %v338 = vrot.slane %v209, 1
        %v339 = vsel %vm271, %v337, %v338
        %v340 = vrot.slane %v210, 1
        %v341 = vsel %vm271, %v338, %v340
        %v342 = vrot.slane %v211, 1
        %v343 = vrot.slane %v212, 1
        %v344 = vsel %vm271, %v342, %v343
        %v345 = vrot.slane %v213, 1
        %v346 = vsel %vm271, %v343, %v345
        %v347 = vrot.slane %v214, 1
        %v348 = vrot.slane %v215, 1
        %v349 = vsel %vm271, %v347, %v348
        %v350 = vrot.slane %v216, 1
        %v351 = vsel %vm271, %v348, %v350
        %352 = vrot.lane.b32.xlu0 %v274, 4
        %v353 = vpop.permute.xlu0 %352
        %354 = vrot.lane.b32.xlu0 %v276, 4
        %v355 = vpop.permute.xlu0 %354
        %356 = vrot.lane.b32.xlu0 %v279, 4
        %v357 = vpop.permute.xlu0 %356
        %358 = vrot.lane.b32.xlu0 %v281, 4
        %v359 = vpop.permute.xlu0 %358
        %360 = vrot.lane.b32.xlu0 %v284, 4
        %v361 = vpop.permute.xlu0 %360
        %362 = vrot.lane.b32.xlu0 %v286, 4
        %v363 = vpop.permute.xlu0 %362
        %364 = vrot.lane.b32.xlu0 %v289, 4
        %v365 = vpop.permute.xlu0 %364
        %366 = vrot.lane.b32.xlu0 %v291, 4
        %v367 = vpop.permute.xlu0 %366
        %368 = vrot.lane.b32.xlu0 %v294, 4
        %v369 = vpop.permute.xlu0 %368
        %370 = vrot.lane.b32.xlu0 %v296, 4
        %v371 = vpop.permute.xlu0 %370
        %372 = vrot.lane.b32.xlu0 %v299, 4
        %v373 = vpop.permute.xlu0 %372
        %374 = vrot.lane.b32.xlu0 %v301, 4
        %v375 = vpop.permute.xlu0 %374
        %376 = vrot.lane.b32.xlu0 %v304, 4
        %v377 = vpop.permute.xlu0 %376
        %378 = vrot.lane.b32.xlu0 %v306, 4
        %v379 = vpop.permute.xlu0 %378
        %380 = vrot.lane.b32.xlu0 %v309, 4
        %v381 = vpop.permute.xlu0 %380
        %382 = vrot.lane.b32.xlu0 %v311, 4
        %v383 = vpop.permute.xlu0 %382
        %384 = vrot.lane.b32.xlu0 %v314, 4
        %v385 = vpop.permute.xlu0 %384
        %386 = vrot.lane.b32.xlu0 %v316, 4
        %v387 = vpop.permute.xlu0 %386
        %388 = vrot.lane.b32.xlu0 %v319, 4
        %v389 = vpop.permute.xlu0 %388
        %390 = vrot.lane.b32.xlu0 %v321, 4
        %v391 = vpop.permute.xlu0 %390
        %392 = vrot.lane.b32.xlu0 %v324, 4
        %v393 = vpop.permute.xlu0 %392
        %394 = vrot.lane.b32.xlu0 %v326, 4
        %v395 = vpop.permute.xlu0 %394
        %396 = vrot.lane.b32.xlu0 %v329, 4
        %v397 = vpop.permute.xlu0 %396
        %398 = vrot.lane.b32.xlu0 %v331, 4
        %v399 = vpop.permute.xlu0 %398
        %400 = vrot.lane.b32.xlu0 %v334, 4
        %v401 = vpop.permute.xlu0 %400
        %402 = vrot.lane.b32.xlu0 %v336, 4
        %v403 = vpop.permute.xlu0 %402
        %404 = vrot.lane.b32.xlu0 %v339, 4
        %v405 = vpop.permute.xlu0 %404
        %406 = vrot.lane.b32.xlu0 %v341, 4
        %v407 = vpop.permute.xlu0 %406
        %408 = vrot.lane.b32.xlu0 %v344, 4
        %v409 = vpop.permute.xlu0 %408
        %410 = vrot.lane.b32.xlu0 %v346, 4
        %v411 = vpop.permute.xlu0 %410
        %412 = vrot.lane.b32.xlu0 %v349, 4
        %v413 = vpop.permute.xlu0 %412
        %414 = vrot.lane.b32.xlu0 %v351, 4
        %v415 = vpop.permute.xlu0 %414
        %vm448 = vcmask 1045504
        %v449 = vrot.slane %v169, 2
        %v450 = vrot.slane %v170, 2
        %v451 = vsel %vm448, %v449, %v450
        %v452 = vrot.slane %v171, 2
        %v453 = vsel %vm448, %v450, %v452
        %v454 = vrot.slane %v172, 2
        %v455 = vrot.slane %v173, 2
        %v456 = vsel %vm448, %v454, %v455
        %v457 = vrot.slane %v174, 2
        %v458 = vsel %vm448, %v455, %v457
        %v459 = vrot.slane %v175, 2
        %v460 = vrot.slane %v176, 2
        %v461 = vsel %vm448, %v459, %v460
        %v462 = vrot.slane %v177, 2
        %v463 = vsel %vm448, %v460, %v462
        %v464 = vrot.slane %v178, 2
        %v465 = vrot.slane %v179, 2
        %v466 = vsel %vm448, %v464, %v465
        %v467 = vrot.slane %v180, 2
        %v468 = vsel %vm448, %v465, %v467
        %v469 = vrot.slane %v181, 2
        %v470 = vrot.slane %v182, 2
        %v471 = vsel %vm448, %v469, %v470
        %v472 = vrot.slane %v183, 2
        %v473 = vsel %vm448, %v470, %v472
        %v474 = vrot.slane %v184, 2
        %v475 = vrot.slane %v185, 2
        %v476 = vsel %vm448, %v474, %v475
        %v477 = vrot.slane %v186, 2
        %v478 = vsel %vm448, %v475, %v477
        %v479 = vrot.slane %v187, 2
        %v480 = vrot.slane %v188, 2
        %v481 = vsel %vm448, %v479, %v480
        %v482 = vrot.slane %v189, 2
        %v483 = vsel %vm448, %v480, %v482
        %v484 = vrot.slane %v190, 2
        %v485 = vrot.slane %v191, 2
        %v486 = vsel %vm448, %v484, %v485
        %v487 = vrot.slane %v192, 2
        %v488 = vsel %vm448, %v485, %v487
        %v489 = vrot.slane %v193, 2
        %v490 = vrot.slane %v194, 2
        %v491 = vsel %vm448, %v489, %v490
        %v492 = vrot.slane %v195, 2
        %v493 = vsel %vm448, %v490, %v492
        %v494 = vrot.slane %v196, 2
        %v495 = vrot.slane %v197, 2
        %v496 = vsel %vm448, %v494, %v495
        %v497 = vrot.slane %v198, 2
        %v498 = vsel %vm448, %v495, %v497
        %v499 = vrot.slane %v199, 2
        %v500 = vrot.slane %v200, 2
        %v501 = vsel %vm448, %v499, %v500
        %v502 = vrot.slane %v201, 2
        %v503 = vsel %vm448, %v500, %v502
        %v504 = vrot.slane %v202, 2
        %v505 = vrot.slane %v203, 2
        %v506 = vsel %vm448, %v504, %v505
        %v507 = vrot.slane %v204, 2
        %v508 = vsel %vm448, %v505, %v507
        %v509 = vrot.slane %v205, 2
        %v510 = vrot.slane %v206, 2
        %v511 = vsel %vm448, %v509, %v510
        %v512 = vrot.slane %v207, 2
        %v513 = vsel %vm448, %v510, %v512
        %v514 = vrot.slane %v208, 2
        %v515 = vrot.slane %v209, 2
        %v516 = vsel %vm448, %v514, %v515
        %v517 = vrot.slane %v210, 2
        %v518 = vsel %vm448, %v515, %v517
        %v519 = vrot.slane %v211, 2
        %v520 = vrot.slane %v212, 2
        %v521 = vsel %vm448, %v519, %v520
        %v522 = vrot.slane %v213, 2
        %v523 = vsel %vm448, %v520, %v522
        %v524 = vrot.slane %v214, 2
        %v525 = vrot.slane %v215, 2
        %v526 = vsel %vm448, %v524, %v525
        %v527 = vrot.slane %v216, 2
        %v528 = vsel %vm448, %v525, %v527
        %529 = vrot.lane.b32.xlu0 %v451, 8
        %v530 = vpop.permute.xlu0 %529
        %531 = vrot.lane.b32.xlu0 %v453, 8
        %v532 = vpop.permute.xlu0 %531
        %533 = vrot.lane.b32.xlu0 %v456, 8
        %v534 = vpop.permute.xlu0 %533
        %535 = vrot.lane.b32.xlu0 %v458, 8
        %v536 = vpop.permute.xlu0 %535
        %537 = vrot.lane.b32.xlu0 %v461, 8
        %v538 = vpop.permute.xlu0 %537
        %539 = vrot.lane.b32.xlu0 %v463, 8
        %v540 = vpop.permute.xlu0 %539
        %541 = vrot.lane.b32.xlu0 %v466, 8
        %v542 = vpop.permute.xlu0 %541
        %543 = vrot.lane.b32.xlu0 %v468, 8
        %v544 = vpop.permute.xlu0 %543
        %545 = vrot.lane.b32.xlu0 %v471, 8
        %v546 = vpop.permute.xlu0 %545
        %547 = vrot.lane.b32.xlu0 %v473, 8
        %v548 = vpop.permute.xlu0 %547
        %549 = vrot.lane.b32.xlu0 %v476, 8
        %v550 = vpop.permute.xlu0 %549
        %551 = vrot.lane.b32.xlu0 %v478, 8
        %v552 = vpop.permute.xlu0 %551
        %553 = vrot.lane.b32.xlu0 %v481, 8
        %v554 = vpop.permute.xlu0 %553
        %555 = vrot.lane.b32.xlu0 %v483, 8
        %v556 = vpop.permute.xlu0 %555
        %557 = vrot.lane.b32.xlu0 %v486, 8
        %v558 = vpop.permute.xlu0 %557
        %559 = vrot.lane.b32.xlu0 %v488, 8
        %v560 = vpop.permute.xlu0 %559
        %561 = vrot.lane.b32.xlu0 %v491, 8
        %v562 = vpop.permute.xlu0 %561
        %563 = vrot.lane.b32.xlu0 %v493, 8
        %v564 = vpop.permute.xlu0 %563
        %565 = vrot.lane.b32.xlu0 %v496, 8
        %v566 = vpop.permute.xlu0 %565
        %567 = vrot.lane.b32.xlu0 %v498, 8
        %v568 = vpop.permute.xlu0 %567
        %569 = vrot.lane.b32.xlu0 %v501, 8
        %v570 = vpop.permute.xlu0 %569
        %571 = vrot.lane.b32.xlu0 %v503, 8
        %v572 = vpop.permute.xlu0 %571
        %573 = vrot.lane.b32.xlu0 %v506, 8
        %v574 = vpop.permute.xlu0 %573
        %575 = vrot.lane.b32.xlu0 %v508, 8
        %v576 = vpop.permute.xlu0 %575
        %577 = vrot.lane.b32.xlu0 %v511, 8
        %v578 = vpop.permute.xlu0 %577
        %579 = vrot.lane.b32.xlu0 %v513, 8
        %v580 = vpop.permute.xlu0 %579
        %581 = vrot.lane.b32.xlu0 %v516, 8
        %v582 = vpop.permute.xlu0 %581
        %583 = vrot.lane.b32.xlu0 %v518, 8
        %v584 = vpop.permute.xlu0 %583
        %585 = vrot.lane.b32.xlu0 %v521, 8
        %v586 = vpop.permute.xlu0 %585
        %587 = vrot.lane.b32.xlu0 %v523, 8
        %v588 = vpop.permute.xlu0 %587
        %589 = vrot.lane.b32.xlu0 %v526, 8
        %v590 = vpop.permute.xlu0 %589
        %591 = vrot.lane.b32.xlu0 %v528, 8
        %v592 = vpop.permute.xlu0 %591
        %627 = vrot.lane.b32.xlu0 %v172, 12
        %v628 = vpop.permute.xlu0 %627
        %629 = vrot.lane.b32.xlu0 %v173, 12
        %v630 = vpop.permute.xlu0 %629
        %631 = vrot.lane.b32.xlu0 %v175, 12
        %v632 = vpop.permute.xlu0 %631
        %633 = vrot.lane.b32.xlu0 %v176, 12
        %v634 = vpop.permute.xlu0 %633
        %635 = vrot.lane.b32.xlu0 %v178, 12
        %v636 = vpop.permute.xlu0 %635
        %637 = vrot.lane.b32.xlu0 %v179, 12
        %v638 = vpop.permute.xlu0 %637
        %639 = vrot.lane.b32.xlu0 %v181, 12
        %v640 = vpop.permute.xlu0 %639
        %641 = vrot.lane.b32.xlu0 %v182, 12
        %v642 = vpop.permute.xlu0 %641
        %643 = vrot.lane.b32.xlu0 %v184, 12
        %v644 = vpop.permute.xlu0 %643
        %645 = vrot.lane.b32.xlu0 %v185, 12
        %v646 = vpop.permute.xlu0 %645
        %647 = vrot.lane.b32.xlu0 %v187, 12
        %v648 = vpop.permute.xlu0 %647
        %649 = vrot.lane.b32.xlu0 %v188, 12
        %v650 = vpop.permute.xlu0 %649
        %651 = vrot.lane.b32.xlu0 %v190, 12
        %v652 = vpop.permute.xlu0 %651
        %653 = vrot.lane.b32.xlu0 %v191, 12
        %v654 = vpop.permute.xlu0 %653
        %655 = vrot.lane.b32.xlu0 %v193, 12
        %v656 = vpop.permute.xlu0 %655
        %657 = vrot.lane.b32.xlu0 %v194, 12
        %v658 = vpop.permute.xlu0 %657
        %659 = vrot.lane.b32.xlu0 %v196, 12
        %v660 = vpop.permute.xlu0 %659
        %661 = vrot.lane.b32.xlu0 %v197, 12
        %v662 = vpop.permute.xlu0 %661
        %663 = vrot.lane.b32.xlu0 %v199, 12
        %v664 = vpop.permute.xlu0 %663
        %665 = vrot.lane.b32.xlu0 %v200, 12
        %v666 = vpop.permute.xlu0 %665
        %667 = vrot.lane.b32.xlu0 %v202, 12
        %v668 = vpop.permute.xlu0 %667
        %669 = vrot.lane.b32.xlu0 %v203, 12
        %v670 = vpop.permute.xlu0 %669
        %671 = vrot.lane.b32.xlu0 %v205, 12
        %v672 = vpop.permute.xlu0 %671
        %673 = vrot.lane.b32.xlu0 %v206, 12
        %v674 = vpop.permute.xlu0 %673
        %675 = vrot.lane.b32.xlu0 %v208, 12
        %v676 = vpop.permute.xlu0 %675
        %677 = vrot.lane.b32.xlu0 %v209, 12
        %v678 = vpop.permute.xlu0 %677
        %679 = vrot.lane.b32.xlu0 %v211, 12
        %v680 = vpop.permute.xlu0 %679
        %681 = vrot.lane.b32.xlu0 %v212, 12
        %v682 = vpop.permute.xlu0 %681
        %683 = vrot.lane.b32.xlu0 %v214, 12
        %v684 = vpop.permute.xlu0 %683
        %685 = vrot.lane.b32.xlu0 %v215, 12
        %v686 = vpop.permute.xlu0 %685
        %687 = vrot.lane.b32.xlu0 %v217, 12
        %v688 = vpop.permute.xlu0 %687
        %689 = vrot.lane.b32.xlu0 %v218, 12
        %v690 = vpop.permute.xlu0 %689
        %v724 = vrot.slane %v217, 1
        %v725 = vrot.slane %v218, 1
        %v726 = vsel %vm271, %v724, %v725
        %v727 = vrot.slane %v219, 1
        %v728 = vsel %vm271, %v725, %v727
        %729 = vrot.lane.b32.xlu0 %v279, 16
        %v730 = vpop.permute.xlu0 %729
        %731 = vrot.lane.b32.xlu0 %v281, 16
        %v732 = vpop.permute.xlu0 %731
        %733 = vrot.lane.b32.xlu0 %v284, 16
        %v734 = vpop.permute.xlu0 %733
        %735 = vrot.lane.b32.xlu0 %v286, 16
        %v736 = vpop.permute.xlu0 %735
        %737 = vrot.lane.b32.xlu0 %v289, 16
        %v738 = vpop.permute.xlu0 %737
        %739 = vrot.lane.b32.xlu0 %v291, 16
        %v740 = vpop.permute.xlu0 %739
        %741 = vrot.lane.b32.xlu0 %v294, 16
        %v742 = vpop.permute.xlu0 %741
        %743 = vrot.lane.b32.xlu0 %v296, 16
        %v744 = vpop.permute.xlu0 %743
        %745 = vrot.lane.b32.xlu0 %v299, 16
        %v746 = vpop.permute.xlu0 %745
        %747 = vrot.lane.b32.xlu0 %v301, 16
        %v748 = vpop.permute.xlu0 %747
        %749 = vrot.lane.b32.xlu0 %v304, 16
        %v750 = vpop.permute.xlu0 %749
        %751 = vrot.lane.b32.xlu0 %v306, 16
        %v752 = vpop.permute.xlu0 %751
        %753 = vrot.lane.b32.xlu0 %v309, 16
        %v754 = vpop.permute.xlu0 %753
        %755 = vrot.lane.b32.xlu0 %v311, 16
        %v756 = vpop.permute.xlu0 %755
        %757 = vrot.lane.b32.xlu0 %v314, 16
        %v758 = vpop.permute.xlu0 %757
        %759 = vrot.lane.b32.xlu0 %v316, 16
        %v760 = vpop.permute.xlu0 %759
        %761 = vrot.lane.b32.xlu0 %v319, 16
        %v762 = vpop.permute.xlu0 %761
        %763 = vrot.lane.b32.xlu0 %v321, 16
        %v764 = vpop.permute.xlu0 %763
        %765 = vrot.lane.b32.xlu0 %v324, 16
        %v766 = vpop.permute.xlu0 %765
        %767 = vrot.lane.b32.xlu0 %v326, 16
        %v768 = vpop.permute.xlu0 %767
        %769 = vrot.lane.b32.xlu0 %v329, 16
        %v770 = vpop.permute.xlu0 %769
        %771 = vrot.lane.b32.xlu0 %v331, 16
        %v772 = vpop.permute.xlu0 %771
        %773 = vrot.lane.b32.xlu0 %v334, 16
        %v774 = vpop.permute.xlu0 %773
        %775 = vrot.lane.b32.xlu0 %v336, 16
        %v776 = vpop.permute.xlu0 %775
        %777 = vrot.lane.b32.xlu0 %v339, 16
        %v778 = vpop.permute.xlu0 %777
        %779 = vrot.lane.b32.xlu0 %v341, 16
        %v780 = vpop.permute.xlu0 %779
        %781 = vrot.lane.b32.xlu0 %v344, 16
        %v782 = vpop.permute.xlu0 %781
        %783 = vrot.lane.b32.xlu0 %v346, 16
        %v784 = vpop.permute.xlu0 %783
        %785 = vrot.lane.b32.xlu0 %v349, 16
        %v786 = vpop.permute.xlu0 %785
        %787 = vrot.lane.b32.xlu0 %v351, 16
        %v788 = vpop.permute.xlu0 %787
        %789 = vrot.lane.b32.xlu0 %v726, 16
        %v790 = vpop.permute.xlu0 %789
        %791 = vrot.lane.b32.xlu0 %v728, 16
        %v792 = vpop.permute.xlu0 %791
        %v825 = vrot.slane %v217, 2
        %v826 = vrot.slane %v218, 2
        %v827 = vsel %vm448, %v825, %v826
        %v828 = vrot.slane %v219, 2
        %v829 = vsel %vm448, %v826, %v828
        %830 = vrot.lane.b32.xlu0 %v456, 20
        %v831 = vpop.permute.xlu0 %830
        %832 = vrot.lane.b32.xlu0 %v458, 20
        %v833 = vpop.permute.xlu0 %832
        %834 = vrot.lane.b32.xlu0 %v461, 20
        %v835 = vpop.permute.xlu0 %834
        %836 = vrot.lane.b32.xlu0 %v463, 20
        %v837 = vpop.permute.xlu0 %836
        %838 = vrot.lane.b32.xlu0 %v466, 20
        %v839 = vpop.permute.xlu0 %838
        %840 = vrot.lane.b32.xlu0 %v468, 20
        %v841 = vpop.permute.xlu0 %840
        %842 = vrot.lane.b32.xlu0 %v471, 20
        %v843 = vpop.permute.xlu0 %842
        %844 = vrot.lane.b32.xlu0 %v473, 20
        %v845 = vpop.permute.xlu0 %844
        %846 = vrot.lane.b32.xlu0 %v476, 20
        %v847 = vpop.permute.xlu0 %846
        %848 = vrot.lane.b32.xlu0 %v478, 20
        %v849 = vpop.permute.xlu0 %848
        %850 = vrot.lane.b32.xlu0 %v481, 20
        %v851 = vpop.permute.xlu0 %850
        %852 = vrot.lane.b32.xlu0 %v483, 20
        %v853 = vpop.permute.xlu0 %852
        %854 = vrot.lane.b32.xlu0 %v486, 20
        %v855 = vpop.permute.xlu0 %854
        %856 = vrot.lane.b32.xlu0 %v488, 20
        %v857 = vpop.permute.xlu0 %856
        %858 = vrot.lane.b32.xlu0 %v491, 20
        %v859 = vpop.permute.xlu0 %858
        %860 = vrot.lane.b32.xlu0 %v493, 20
        %v861 = vpop.permute.xlu0 %860
        %862 = vrot.lane.b32.xlu0 %v496, 20
        %v863 = vpop.permute.xlu0 %862
        %864 = vrot.lane.b32.xlu0 %v498, 20
        %v865 = vpop.permute.xlu0 %864
        %866 = vrot.lane.b32.xlu0 %v501, 20
        %v867 = vpop.permute.xlu0 %866
        %868 = vrot.lane.b32.xlu0 %v503, 20
        %v869 = vpop.permute.xlu0 %868
        %870 = vrot.lane.b32.xlu0 %v506, 20
        %v871 = vpop.permute.xlu0 %870
        %872 = vrot.lane.b32.xlu0 %v508, 20
        %v873 = vpop.permute.xlu0 %872
        %874 = vrot.lane.b32.xlu0 %v511, 20
        %v875 = vpop.permute.xlu0 %874
        %876 = vrot.lane.b32.xlu0 %v513, 20
        %v877 = vpop.permute.xlu0 %876
        %878 = vrot.lane.b32.xlu0 %v516, 20
        %v879 = vpop.permute.xlu0 %878
        %880 = vrot.lane.b32.xlu0 %v518, 20
        %v881 = vpop.permute.xlu0 %880
        %882 = vrot.lane.b32.xlu0 %v521, 20
        %v883 = vpop.permute.xlu0 %882
        %884 = vrot.lane.b32.xlu0 %v523, 20
        %v885 = vpop.permute.xlu0 %884
        %886 = vrot.lane.b32.xlu0 %v526, 20
        %v887 = vpop.permute.xlu0 %886
        %888 = vrot.lane.b32.xlu0 %v528, 20
        %v889 = vpop.permute.xlu0 %888
        %890 = vrot.lane.b32.xlu0 %v827, 20
        %v891 = vpop.permute.xlu0 %890
        %892 = vrot.lane.b32.xlu0 %v829, 20
        %v893 = vpop.permute.xlu0 %892
        %928 = vrot.lane.b32.xlu0 %v175, 24
        %v929 = vpop.permute.xlu0 %928
        %930 = vrot.lane.b32.xlu0 %v176, 24
        %v931 = vpop.permute.xlu0 %930
        %932 = vrot.lane.b32.xlu0 %v178, 24
        %v933 = vpop.permute.xlu0 %932
        %934 = vrot.lane.b32.xlu0 %v179, 24
        %v935 = vpop.permute.xlu0 %934
        %936 = vrot.lane.b32.xlu0 %v181, 24
        %v937 = vpop.permute.xlu0 %936
        %938 = vrot.lane.b32.xlu0 %v182, 24
        %v939 = vpop.permute.xlu0 %938
        %940 = vrot.lane.b32.xlu0 %v184, 24
        %v941 = vpop.permute.xlu0 %940
        %942 = vrot.lane.b32.xlu0 %v185, 24
        %v943 = vpop.permute.xlu0 %942
        %944 = vrot.lane.b32.xlu0 %v187, 24
        %v945 = vpop.permute.xlu0 %944
        %946 = vrot.lane.b32.xlu0 %v188, 24
        %v947 = vpop.permute.xlu0 %946
        %948 = vrot.lane.b32.xlu0 %v190, 24
        %v949 = vpop.permute.xlu0 %948
        %950 = vrot.lane.b32.xlu0 %v191, 24
        %v951 = vpop.permute.xlu0 %950
        %952 = vrot.lane.b32.xlu0 %v193, 24
        %v953 = vpop.permute.xlu0 %952
        %954 = vrot.lane.b32.xlu0 %v194, 24
        %v955 = vpop.permute.xlu0 %954
        %956 = vrot.lane.b32.xlu0 %v196, 24
        %v957 = vpop.permute.xlu0 %956
        %958 = vrot.lane.b32.xlu0 %v197, 24
        %v959 = vpop.permute.xlu0 %958
        %960 = vrot.lane.b32.xlu0 %v199, 24
        %v961 = vpop.permute.xlu0 %960
        %962 = vrot.lane.b32.xlu0 %v200, 24
        %v963 = vpop.permute.xlu0 %962
        %964 = vrot.lane.b32.xlu0 %v202, 24
        %v965 = vpop.permute.xlu0 %964
        %966 = vrot.lane.b32.xlu0 %v203, 24
        %v967 = vpop.permute.xlu0 %966
        %968 = vrot.lane.b32.xlu0 %v205, 24
        %v969 = vpop.permute.xlu0 %968
        %970 = vrot.lane.b32.xlu0 %v206, 24
        %v971 = vpop.permute.xlu0 %970
        %972 = vrot.lane.b32.xlu0 %v208, 24
        %v973 = vpop.permute.xlu0 %972
        %974 = vrot.lane.b32.xlu0 %v209, 24
        %v975 = vpop.permute.xlu0 %974
        %976 = vrot.lane.b32.xlu0 %v211, 24
        %v977 = vpop.permute.xlu0 %976
        %978 = vrot.lane.b32.xlu0 %v212, 24
        %v979 = vpop.permute.xlu0 %978
        %980 = vrot.lane.b32.xlu0 %v214, 24
        %v981 = vpop.permute.xlu0 %980
        %982 = vrot.lane.b32.xlu0 %v215, 24
        %v983 = vpop.permute.xlu0 %982
        %984 = vrot.lane.b32.xlu0 %v217, 24
        %v985 = vpop.permute.xlu0 %984
        %986 = vrot.lane.b32.xlu0 %v218, 24
        %v987 = vpop.permute.xlu0 %986
        %988 = vrot.lane.b32.xlu0 %v220, 24
        %v989 = vpop.permute.xlu0 %988
        %990 = vrot.lane.b32.xlu0 %v221, 24
        %v991 = vpop.permute.xlu0 %990
        %v1025 = vrot.slane %v220, 1
        %v1026 = vrot.slane %v221, 1
        %v1027 = vsel %vm271, %v1025, %v1026
        %v1028 = vrot.slane %v222, 1
        %v1029 = vsel %vm271, %v1026, %v1028
        %1030 = vrot.lane.b32.xlu0 %v284, 28
        %v1031 = vpop.permute.xlu0 %1030
        %1032 = vrot.lane.b32.xlu0 %v286, 28
        %v1033 = vpop.permute.xlu0 %1032
        %1034 = vrot.lane.b32.xlu0 %v289, 28
        %v1035 = vpop.permute.xlu0 %1034
        %1036 = vrot.lane.b32.xlu0 %v291, 28
        %v1037 = vpop.permute.xlu0 %1036
        %1038 = vrot.lane.b32.xlu0 %v294, 28
        %v1039 = vpop.permute.xlu0 %1038
        %1040 = vrot.lane.b32.xlu0 %v296, 28
        %v1041 = vpop.permute.xlu0 %1040
        %1042 = vrot.lane.b32.xlu0 %v299, 28
        %v1043 = vpop.permute.xlu0 %1042
        %1044 = vrot.lane.b32.xlu0 %v301, 28
        %v1045 = vpop.permute.xlu0 %1044
        %1046 = vrot.lane.b32.xlu0 %v304, 28
        %v1047 = vpop.permute.xlu0 %1046
        %1048 = vrot.lane.b32.xlu0 %v306, 28
        %v1049 = vpop.permute.xlu0 %1048
        %1050 = vrot.lane.b32.xlu0 %v309, 28
        %v1051 = vpop.permute.xlu0 %1050
        %1052 = vrot.lane.b32.xlu0 %v311, 28
        %v1053 = vpop.permute.xlu0 %1052
        %1054 = vrot.lane.b32.xlu0 %v314, 28
        %v1055 = vpop.permute.xlu0 %1054
        %1056 = vrot.lane.b32.xlu0 %v316, 28
        %v1057 = vpop.permute.xlu0 %1056
        %1058 = vrot.lane.b32.xlu0 %v319, 28
        %v1059 = vpop.permute.xlu0 %1058
        %1060 = vrot.lane.b32.xlu0 %v321, 28
        %v1061 = vpop.permute.xlu0 %1060
        %1062 = vrot.lane.b32.xlu0 %v324, 28
        %v1063 = vpop.permute.xlu0 %1062
        %1064 = vrot.lane.b32.xlu0 %v326, 28
        %v1065 = vpop.permute.xlu0 %1064
        %1066 = vrot.lane.b32.xlu0 %v329, 28
        %v1067 = vpop.permute.xlu0 %1066
        %1068 = vrot.lane.b32.xlu0 %v331, 28
        %v1069 = vpop.permute.xlu0 %1068
        %1070 = vrot.lane.b32.xlu0 %v334, 28
        %v1071 = vpop.permute.xlu0 %1070
        %1072 = vrot.lane.b32.xlu0 %v336, 28
        %v1073 = vpop.permute.xlu0 %1072
        %1074 = vrot.lane.b32.xlu0 %v339, 28
        %v1075 = vpop.permute.xlu0 %1074
        %1076 = vrot.lane.b32.xlu0 %v341, 28
        %v1077 = vpop.permute.xlu0 %1076
        %1078 = vrot.lane.b32.xlu0 %v344, 28
        %v1079 = vpop.permute.xlu0 %1078
        %1080 = vrot.lane.b32.xlu0 %v346, 28
        %v1081 = vpop.permute.xlu0 %1080
        %1082 = vrot.lane.b32.xlu0 %v349, 28
        %v1083 = vpop.permute.xlu0 %1082
        %1084 = vrot.lane.b32.xlu0 %v351, 28
        %v1085 = vpop.permute.xlu0 %1084
        %1086 = vrot.lane.b32.xlu0 %v726, 28
        %v1087 = vpop.permute.xlu0 %1086
        %1088 = vrot.lane.b32.xlu0 %v728, 28
        %v1089 = vpop.permute.xlu0 %1088
        %1090 = vrot.lane.b32.xlu0 %v1027, 28
        %v1091 = vpop.permute.xlu0 %1090
        %1092 = vrot.lane.b32.xlu0 %v1029, 28
        %v1093 = vpop.permute.xlu0 %1092
        %v1126 = vrot.slane %v220, 2
        %v1127 = vrot.slane %v221, 2
        %v1128 = vsel %vm448, %v1126, %v1127
        %v1129 = vrot.slane %v222, 2
        %v1130 = vsel %vm448, %v1127, %v1129
        %1131 = vrot.lane.b32.xlu0 %v461, 32
        %v1132 = vpop.permute.xlu0 %1131
        %1133 = vrot.lane.b32.xlu0 %v463, 32
        %v1134 = vpop.permute.xlu0 %1133
        %1135 = vrot.lane.b32.xlu0 %v466, 32
        %v1136 = vpop.permute.xlu0 %1135
        %1137 = vrot.lane.b32.xlu0 %v468, 32
        %v1138 = vpop.permute.xlu0 %1137
        %1139 = vrot.lane.b32.xlu0 %v471, 32
        %v1140 = vpop.permute.xlu0 %1139
        %1141 = vrot.lane.b32.xlu0 %v473, 32
        %v1142 = vpop.permute.xlu0 %1141
        %1143 = vrot.lane.b32.xlu0 %v476, 32
        %v1144 = vpop.permute.xlu0 %1143
        %1145 = vrot.lane.b32.xlu0 %v478, 32
        %v1146 = vpop.permute.xlu0 %1145
        %1147 = vrot.lane.b32.xlu0 %v481, 32
        %v1148 = vpop.permute.xlu0 %1147
        %1149 = vrot.lane.b32.xlu0 %v483, 32
        %v1150 = vpop.permute.xlu0 %1149
        %1151 = vrot.lane.b32.xlu0 %v486, 32
        %v1152 = vpop.permute.xlu0 %1151
        %1153 = vrot.lane.b32.xlu0 %v488, 32
        %v1154 = vpop.permute.xlu0 %1153
        %1155 = vrot.lane.b32.xlu0 %v491, 32
        %v1156 = vpop.permute.xlu0 %1155
        %1157 = vrot.lane.b32.xlu0 %v493, 32
        %v1158 = vpop.permute.xlu0 %1157
        %1159 = vrot.lane.b32.xlu0 %v496, 32
        %v1160 = vpop.permute.xlu0 %1159
        %1161 = vrot.lane.b32.xlu0 %v498, 32
        %v1162 = vpop.permute.xlu0 %1161
        %1163 = vrot.lane.b32.xlu0 %v501, 32
        %v1164 = vpop.permute.xlu0 %1163
        %1165 = vrot.lane.b32.xlu0 %v503, 32
        %v1166 = vpop.permute.xlu0 %1165
        %1167 = vrot.lane.b32.xlu0 %v506, 32
        %v1168 = vpop.permute.xlu0 %1167
        %1169 = vrot.lane.b32.xlu0 %v508, 32
        %v1170 = vpop.permute.xlu0 %1169
        %1171 = vrot.lane.b32.xlu0 %v511, 32
        %v1172 = vpop.permute.xlu0 %1171
        %1173 = vrot.lane.b32.xlu0 %v513, 32
        %v1174 = vpop.permute.xlu0 %1173
        %1175 = vrot.lane.b32.xlu0 %v516, 32
        %v1176 = vpop.permute.xlu0 %1175
        %1177 = vrot.lane.b32.xlu0 %v518, 32
        %v1178 = vpop.permute.xlu0 %1177
        %1179 = vrot.lane.b32.xlu0 %v521, 32
        %v1180 = vpop.permute.xlu0 %1179
        %1181 = vrot.lane.b32.xlu0 %v523, 32
        %v1182 = vpop.permute.xlu0 %1181
        %1183 = vrot.lane.b32.xlu0 %v526, 32
        %v1184 = vpop.permute.xlu0 %1183
        %1185 = vrot.lane.b32.xlu0 %v528, 32
        %v1186 = vpop.permute.xlu0 %1185
        %1187 = vrot.lane.b32.xlu0 %v827, 32
        %v1188 = vpop.permute.xlu0 %1187
        %1189 = vrot.lane.b32.xlu0 %v829, 32
        %v1190 = vpop.permute.xlu0 %1189
        %1191 = vrot.lane.b32.xlu0 %v1128, 32
        %v1192 = vpop.permute.xlu0 %1191
        %1193 = vrot.lane.b32.xlu0 %v1130, 32
        %v1194 = vpop.permute.xlu0 %1193
        %vm1227 = vcmask 31744
        %v1228 = vsel %vm1227, %v169, %v353
        %v1229 = vsel %vm1227, %v170, %v355
        %v1230 = vsel %vm1227, %v172, %v357
        %v1231 = vsel %vm1227, %v173, %v359
        %v1232 = vsel %vm1227, %v175, %v361
        %v1233 = vsel %vm1227, %v176, %v363
        %v1234 = vsel %vm1227, %v178, %v365
        %v1235 = vsel %vm1227, %v179, %v367
        %v1236 = vsel %vm1227, %v181, %v369
        %v1237 = vsel %vm1227, %v182, %v371
        %v1238 = vsel %vm1227, %v184, %v373
        %v1239 = vsel %vm1227, %v185, %v375
        %v1240 = vsel %vm1227, %v187, %v377
        %v1241 = vsel %vm1227, %v188, %v379
        %v1242 = vsel %vm1227, %v190, %v381
        %v1243 = vsel %vm1227, %v191, %v383
        %v1244 = vsel %vm1227, %v193, %v385
        %v1245 = vsel %vm1227, %v194, %v387
        %v1246 = vsel %vm1227, %v196, %v389
        %v1247 = vsel %vm1227, %v197, %v391
        %v1248 = vsel %vm1227, %v199, %v393
        %v1249 = vsel %vm1227, %v200, %v395
        %v1250 = vsel %vm1227, %v202, %v397
        %v1251 = vsel %vm1227, %v203, %v399
        %v1252 = vsel %vm1227, %v205, %v401
        %v1253 = vsel %vm1227, %v206, %v403
        %v1254 = vsel %vm1227, %v208, %v405
        %v1255 = vsel %vm1227, %v209, %v407
        %v1256 = vsel %vm1227, %v211, %v409
        %v1257 = vsel %vm1227, %v212, %v411
        %v1258 = vsel %vm1227, %v214, %v413
        %v1259 = vsel %vm1227, %v215, %v415
        %vm1260 = vcmask 64512
        %v1261 = vsel %vm1260, %v1228, %v530
        %v1262 = vsel %vm1260, %v1229, %v532
        %v1263 = vsel %vm1260, %v1230, %v534
        %v1264 = vsel %vm1260, %v1231, %v536
        %v1265 = vsel %vm1260, %v1232, %v538
        %v1266 = vsel %vm1260, %v1233, %v540
        %v1267 = vsel %vm1260, %v1234, %v542
        %v1268 = vsel %vm1260, %v1235, %v544
        %v1269 = vsel %vm1260, %v1236, %v546
        %v1270 = vsel %vm1260, %v1237, %v548
        %v1271 = vsel %vm1260, %v1238, %v550
        %v1272 = vsel %vm1260, %v1239, %v552
        %v1273 = vsel %vm1260, %v1240, %v554
        %v1274 = vsel %vm1260, %v1241, %v556
        %v1275 = vsel %vm1260, %v1242, %v558
        %v1276 = vsel %vm1260, %v1243, %v560
        %v1277 = vsel %vm1260, %v1244, %v562
        %v1278 = vsel %vm1260, %v1245, %v564
        %v1279 = vsel %vm1260, %v1246, %v566
        %v1280 = vsel %vm1260, %v1247, %v568
        %v1281 = vsel %vm1260, %v1248, %v570
        %v1282 = vsel %vm1260, %v1249, %v572
        %v1283 = vsel %vm1260, %v1250, %v574
        %v1284 = vsel %vm1260, %v1251, %v576
        %v1285 = vsel %vm1260, %v1252, %v578
        %v1286 = vsel %vm1260, %v1253, %v580
        %v1287 = vsel %vm1260, %v1254, %v582
        %v1288 = vsel %vm1260, %v1255, %v584
        %v1289 = vsel %vm1260, %v1256, %v586
        %v1290 = vsel %vm1260, %v1257, %v588
        %v1291 = vsel %vm1260, %v1258, %v590
        %v1292 = vsel %vm1260, %v1259, %v592
        %vm1293 = vcmask 97280
        %v1294 = vsel %vm1293, %v1261, %v628
        %v1295 = vsel %vm1293, %v1262, %v630
        %v1296 = vsel %vm1293, %v1263, %v632
        %v1297 = vsel %vm1293, %v1264, %v634
        %v1298 = vsel %vm1293, %v1265, %v636
        %v1299 = vsel %vm1293, %v1266, %v638
        %v1300 = vsel %vm1293, %v1267, %v640
        %v1301 = vsel %vm1293, %v1268, %v642
        %v1302 = vsel %vm1293, %v1269, %v644
        %v1303 = vsel %vm1293, %v1270, %v646
        %v1304 = vsel %vm1293, %v1271, %v648
        %v1305 = vsel %vm1293, %v1272, %v650
        %v1306 = vsel %vm1293, %v1273, %v652
        %v1307 = vsel %vm1293, %v1274, %v654
        %v1308 = vsel %vm1293, %v1275, %v656
        %v1309 = vsel %vm1293, %v1276, %v658
        %v1310 = vsel %vm1293, %v1277, %v660
        %v1311 = vsel %vm1293, %v1278, %v662
        %v1312 = vsel %vm1293, %v1279, %v664
        %v1313 = vsel %vm1293, %v1280, %v666
        %v1314 = vsel %vm1293, %v1281, %v668
        %v1315 = vsel %vm1293, %v1282, %v670
        %v1316 = vsel %vm1293, %v1283, %v672
        %v1317 = vsel %vm1293, %v1284, %v674
        %v1318 = vsel %vm1293, %v1285, %v676
        %v1319 = vsel %vm1293, %v1286, %v678
        %v1320 = vsel %vm1293, %v1287, %v680
        %v1321 = vsel %vm1293, %v1288, %v682
        %v1322 = vsel %vm1293, %v1289, %v684
        %v1323 = vsel %vm1293, %v1290, %v686
        %v1324 = vsel %vm1293, %v1291, %v688
        %v1325 = vsel %vm1293, %v1292, %v690
        %vm1326 = vcmask 130048
        %v1327 = vsel %vm1326, %v1294, %v730
        %v1328 = vsel %vm1326, %v1295, %v732
        %v1329 = vsel %vm1326, %v1296, %v734
        %v1330 = vsel %vm1326, %v1297, %v736
        %v1331 = vsel %vm1326, %v1298, %v738
        %v1332 = vsel %vm1326, %v1299, %v740
        %v1333 = vsel %vm1326, %v1300, %v742
        %v1334 = vsel %vm1326, %v1301, %v744
        %v1335 = vsel %vm1326, %v1302, %v746
        %v1336 = vsel %vm1326, %v1303, %v748
        %v1337 = vsel %vm1326, %v1304, %v750
        %v1338 = vsel %vm1326, %v1305, %v752
        %v1339 = vsel %vm1326, %v1306, %v754
        %v1340 = vsel %vm1326, %v1307, %v756
        %v1341 = vsel %vm1326, %v1308, %v758
        %v1342 = vsel %vm1326, %v1309, %v760
        %v1343 = vsel %vm1326, %v1310, %v762
        %v1344 = vsel %vm1326, %v1311, %v764
        %v1345 = vsel %vm1326, %v1312, %v766
        %v1346 = vsel %vm1326, %v1313, %v768
        %v1347 = vsel %vm1326, %v1314, %v770
        %v1348 = vsel %vm1326, %v1315, %v772
        %v1349 = vsel %vm1326, %v1316, %v774
        %v1350 = vsel %vm1326, %v1317, %v776
        %v1351 = vsel %vm1326, %v1318, %v778
        %v1352 = vsel %vm1326, %v1319, %v780
        %v1353 = vsel %vm1326, %v1320, %v782
        %v1354 = vsel %vm1326, %v1321, %v784
        %v1355 = vsel %vm1326, %v1322, %v786
        %v1356 = vsel %vm1326, %v1323, %v788
        %v1357 = vsel %vm1326, %v1324, %v790
        %v1358 = vsel %vm1326, %v1325, %v792
        %vm1359 = vcmask 162816
        %v1360 = vsel %vm1359, %v1327, %v831
        %v1361 = vsel %vm1359, %v1328, %v833
        %v1362 = vsel %vm1359, %v1329, %v835
        %v1363 = vsel %vm1359, %v1330, %v837
        %v1364 = vsel %vm1359, %v1331, %v839
        %v1365 = vsel %vm1359, %v1332, %v841
        %v1366 = vsel %vm1359, %v1333, %v843
        %v1367 = vsel %vm1359, %v1334, %v845
        %v1368 = vsel %vm1359, %v1335, %v847
        %v1369 = vsel %vm1359, %v1336, %v849
        %v1370 = vsel %vm1359, %v1337, %v851
        %v1371 = vsel %vm1359, %v1338, %v853
        %v1372 = vsel %vm1359, %v1339, %v855
        %v1373 = vsel %vm1359, %v1340, %v857
        %v1374 = vsel %vm1359, %v1341, %v859
        %v1375 = vsel %vm1359, %v1342, %v861
        %v1376 = vsel %vm1359, %v1343, %v863
        %v1377 = vsel %vm1359, %v1344, %v865
        %v1378 = vsel %vm1359, %v1345, %v867
        %v1379 = vsel %vm1359, %v1346, %v869
        %v1380 = vsel %vm1359, %v1347, %v871
        %v1381 = vsel %vm1359, %v1348, %v873
        %v1382 = vsel %vm1359, %v1349, %v875
        %v1383 = vsel %vm1359, %v1350, %v877
        %v1384 = vsel %vm1359, %v1351, %v879
        %v1385 = vsel %vm1359, %v1352, %v881
        %v1386 = vsel %vm1359, %v1353, %v883
        %v1387 = vsel %vm1359, %v1354, %v885
        %v1388 = vsel %vm1359, %v1355, %v887
        %v1389 = vsel %vm1359, %v1356, %v889
        %v1390 = vsel %vm1359, %v1357, %v891
        %v1391 = vsel %vm1359, %v1358, %v893
        %vm1392 = vcmask 195584
        %v1393 = vsel %vm1392, %v1360, %v929
        %v1394 = vsel %vm1392, %v1361, %v931
        %v1395 = vsel %vm1392, %v1362, %v933
        %v1396 = vsel %vm1392, %v1363, %v935
        %v1397 = vsel %vm1392, %v1364, %v937
        %v1398 = vsel %vm1392, %v1365, %v939
        %v1399 = vsel %vm1392, %v1366, %v941
        %v1400 = vsel %vm1392, %v1367, %v943
        %v1401 = vsel %vm1392, %v1368, %v945
        %v1402 = vsel %vm1392, %v1369, %v947
        %v1403 = vsel %vm1392, %v1370, %v949
        %v1404 = vsel %vm1392, %v1371, %v951
        %v1405 = vsel %vm1392, %v1372, %v953
        %v1406 = vsel %vm1392, %v1373, %v955
        %v1407 = vsel %vm1392, %v1374, %v957
        %v1408 = vsel %vm1392, %v1375, %v959
        %v1409 = vsel %vm1392, %v1376, %v961
        %v1410 = vsel %vm1392, %v1377, %v963
        %v1411 = vsel %vm1392, %v1378, %v965
        %v1412 = vsel %vm1392, %v1379, %v967
        %v1413 = vsel %vm1392, %v1380, %v969
        %v1414 = vsel %vm1392, %v1381, %v971
        %v1415 = vsel %vm1392, %v1382, %v973
        %v1416 = vsel %vm1392, %v1383, %v975
        %v1417 = vsel %vm1392, %v1384, %v977
        %v1418 = vsel %vm1392, %v1385, %v979
        %v1419 = vsel %vm1392, %v1386, %v981
        %v1420 = vsel %vm1392, %v1387, %v983
        %v1421 = vsel %vm1392, %v1388, %v985
        %v1422 = vsel %vm1392, %v1389, %v987
        %v1423 = vsel %vm1392, %v1390, %v989
        %v1424 = vsel %vm1392, %v1391, %v991
        %vm1425 = vcmask 228352
        %v1426 = vsel %vm1425, %v1393, %v1031
        %v1427 = vsel %vm1425, %v1394, %v1033
        %v1428 = vsel %vm1425, %v1395, %v1035
        %v1429 = vsel %vm1425, %v1396, %v1037
        %v1430 = vsel %vm1425, %v1397, %v1039
        %v1431 = vsel %vm1425, %v1398, %v1041
        %v1432 = vsel %vm1425, %v1399, %v1043
        %v1433 = vsel %vm1425, %v1400, %v1045
        %v1434 = vsel %vm1425, %v1401, %v1047
        %v1435 = vsel %vm1425, %v1402, %v1049
        %v1436 = vsel %vm1425, %v1403, %v1051
        %v1437 = vsel %vm1425, %v1404, %v1053
        %v1438 = vsel %vm1425, %v1405, %v1055
        %v1439 = vsel %vm1425, %v1406, %v1057
        %v1440 = vsel %vm1425, %v1407, %v1059
        %v1441 = vsel %vm1425, %v1408, %v1061
        %v1442 = vsel %vm1425, %v1409, %v1063
        %v1443 = vsel %vm1425, %v1410, %v1065
        %v1444 = vsel %vm1425, %v1411, %v1067
        %v1445 = vsel %vm1425, %v1412, %v1069
        %v1446 = vsel %vm1425, %v1413, %v1071
        %v1447 = vsel %vm1425, %v1414, %v1073
        %v1448 = vsel %vm1425, %v1415, %v1075
        %v1449 = vsel %vm1425, %v1416, %v1077
        %v1450 = vsel %vm1425, %v1417, %v1079
        %v1451 = vsel %vm1425, %v1418, %v1081
        %v1452 = vsel %vm1425, %v1419, %v1083
        %v1453 = vsel %vm1425, %v1420, %v1085
        %v1454 = vsel %vm1425, %v1421, %v1087
        %v1455 = vsel %vm1425, %v1422, %v1089
        %v1456 = vsel %vm1425, %v1423, %v1091
        %v1457 = vsel %vm1425, %v1424, %v1093
        %vm1458 = vcmask 261120
        %v1459 = vsel %vm1458, %v1426, %v1132
        %v1460 = vsel %vm1458, %v1427, %v1134
        %v1461 = vsel %vm1458, %v1428, %v1136
        %v1462 = vsel %vm1458, %v1429, %v1138
        %v1463 = vsel %vm1458, %v1430, %v1140
        %v1464 = vsel %vm1458, %v1431, %v1142
        %v1465 = vsel %vm1458, %v1432, %v1144
        %v1466 = vsel %vm1458, %v1433, %v1146
        %v1467 = vsel %vm1458, %v1434, %v1148
        %v1468 = vsel %vm1458, %v1435, %v1150
        %v1469 = vsel %vm1458, %v1436, %v1152
        %v1470 = vsel %vm1458, %v1437, %v1154
        %v1471 = vsel %vm1458, %v1438, %v1156
        %v1472 = vsel %vm1458, %v1439, %v1158
        %v1473 = vsel %vm1458, %v1440, %v1160
        %v1474 = vsel %vm1458, %v1441, %v1162
        %v1475 = vsel %vm1458, %v1442, %v1164
        %v1476 = vsel %vm1458, %v1443, %v1166
        %v1477 = vsel %vm1458, %v1444, %v1168
        %v1478 = vsel %vm1458, %v1445, %v1170
        %v1479 = vsel %vm1458, %v1446, %v1172
        %v1480 = vsel %vm1458, %v1447, %v1174
        %v1481 = vsel %vm1458, %v1448, %v1176
        %v1482 = vsel %vm1458, %v1449, %v1178
        %v1483 = vsel %vm1458, %v1450, %v1180
        %v1484 = vsel %vm1458, %v1451, %v1182
        %v1485 = vsel %vm1458, %v1452, %v1184
        %v1486 = vsel %vm1458, %v1453, %v1186
        %v1487 = vsel %vm1458, %v1454, %v1188
        %v1488 = vsel %vm1458, %v1455, %v1190
        %v1489 = vsel %vm1458, %v1456, %v1192
        %v1490 = vsel %vm1458, %v1457, %v1194
        %v1491 = vld [vmem:[%s1] sm:$0xff]
        %v1492 = vld [vmem:[%s1 + $0x8] sm:$0xff]
        %v1493 = vld [vmem:[%s1 + $0x10] sm:$0xff]
        %v1494 = vld [vmem:[%s1 + $0x18] sm:$0xff]
        %v1495 = vld [vmem:[%s1 + $0x20] sm:$0xf]
        %v1496 = vld [vmem:[%s2] sm:$0x1]
        %v1498 = vlaneseq
        %v1499 = vshrl.u32 %v1498, 7
        %v1500 = vsub.s32 0, %v1499
        %v1501 = vrot.slane %v1496, %v1500
        %vm1503 = vcmask 293888
        %v1505 = vsel %vm1503, %v1459, 0
        %v1508 = vsel %vm1503, %v1460, 0
        %v1511 = vsel %vm1503, %v1461, 0
        %v1514 = vsel %vm1503, %v1462, 0
        %v1517 = vsel %vm1503, %v1463, 0
        %v1520 = vsel %vm1503, %v1464, 0
        %v1523 = vsel %vm1503, %v1465, 0
        %v1526 = vsel %vm1503, %v1466, 0
        %v1529 = vsel %vm1503, %v1467, 0
        %v1532 = vsel %vm1503, %v1468, 0
        %v1535 = vsel %vm1503, %v1469, 0
        %v1538 = vsel %vm1503, %v1470, 0
        %v1541 = vsel %vm1503, %v1471, 0
        %v1544 = vsel %vm1503, %v1472, 0
        %v1547 = vsel %vm1503, %v1473, 0
        %v1550 = vsel %vm1503, %v1474, 0
        %v1553 = vsel %vm1503, %v1475, 0
        %v1556 = vsel %vm1503, %v1476, 0
        %v1559 = vsel %vm1503, %v1477, 0
        %v1562 = vsel %vm1503, %v1478, 0
        %v1565 = vsel %vm1503, %v1479, 0
        %v1568 = vsel %vm1503, %v1480, 0
        %v1571 = vsel %vm1503, %v1481, 0
        %v1574 = vsel %vm1503, %v1482, 0
        %v1577 = vsel %vm1503, %v1483, 0
        %v1580 = vsel %vm1503, %v1484, 0
        %v1583 = vsel %vm1503, %v1485, 0
        %v1586 = vsel %vm1503, %v1486, 0
        %v1589 = vsel %vm1503, %v1487, 0
        %v1592 = vsel %vm1503, %v1488, 0
        %v1595 = vsel %vm1503, %v1489, 0
        %v1598 = vsel %vm1503, %v1490, 0
        %vm1600 = vcmask 1043456
        %v1602 = vsel %vm1600, %v1495, 0
        %1604 = vmatprep.subr.mxu0 0.0
        %1605 = vmatpush1.msra.mxu0 %v1491
        %1606 = vmatprep.subr.mxu0 0.0
        %1607 = vmatpush1.msra.mxu0 %v1492
        %1608 = vmatprep.subr.mxu0 0.0
        %1609 = vmatpush1.msra.mxu0 %v1493
        %1610 = vmatprep.subr.mxu0 0.0
        %1611 = vmatpush1.msra.mxu0 %v1494
        %1612 = vmatprep.subr.mxu0 0.0
        %1613 = vmatpush1.msra.mxu0 %v1602
        %1614 = vmatprep.subr.mxu0 0.0
        %1615 = vmatpush1.msra.mxu0 0.0
        %1616 = vmatprep.subr.mxu0 0.0
        %1617 = vmatpush1.msra.mxu0 0.0
        %1618 = vmatprep.subr.mxu0 0.0
        %1619 = vmatpush1.msra.mxu0 0.0
        %1620 = vmatprep.subr.mxu0 0.0
        %1621 = vmatpush1.msra.mxu0 0.0
        %1622 = vmatprep.subr.mxu0 0.0
        %1623 = vmatpush1.msra.mxu0 0.0
        %1624 = vmatprep.subr.mxu0 0.0
        %1625 = vmatpush1.msra.mxu0 0.0
        %1626 = vmatprep.subr.mxu0 0.0
        %1627 = vmatpush1.msra.mxu0 0.0
        %1628 = vmatprep.subr.mxu0 0.0
        %1629 = vmatpush1.msra.mxu0 0.0
        %1630 = vmatprep.subr.mxu0 0.0
        %1631 = vmatpush1.msra.mxu0 0.0
        %1632 = vmatprep.subr.mxu0 0.0
        %1633 = vmatpush1.msra.mxu0 0.0
        %1634 = vmatprep.subr.mxu0 0.0
        %1635 = vmatpush1.msra.mxu0 0.0
        %1636 = vmatprep.subr.mxu0 0.0
        %1637 = vmatpush1.msra.mxu0 0.0
        %1638 = vmatprep.subr.mxu0 0.0
        %1639 = vmatpush1.msra.mxu0 0.0
        %1640 = vmatprep.subr.mxu0 0.0
        %1641 = vmatpush1.msra.mxu0 0.0
        %1642 = vmatprep.subr.mxu0 0.0
        %1643 = vmatpush1.msra.mxu0 0.0
        %1644 = vmatprep.subr.mxu0 0.0
        %1645 = vmatpush1.msra.mxu0 0.0
        %1646 = vmatprep.subr.mxu0 0.0
        %1647 = vmatpush1.msra.mxu0 0.0
        %1648 = vmatprep.subr.mxu0 0.0
        %1649 = vmatpush1.msra.mxu0 0.0
        %1650 = vmatprep.subr.mxu0 0.0
        %1651 = vmatpush1.msra.mxu0 0.0
        %1652 = vmatprep.subr.mxu0 0.0
        %1653 = vmatpush1.msra.mxu0 0.0
        %1654 = vmatprep.subr.mxu0 0.0
        %1655 = vmatpush1.msra.mxu0 0.0
        %1656 = vmatprep.subr.mxu0 0.0
        %1657 = vmatpush1.msra.mxu0 0.0
        %1658 = vmatprep.subr.mxu0 0.0
        %1659 = vmatpush1.msra.mxu0 0.0
        %1660 = vmatprep.subr.mxu0 0.0
        %1661 = vmatpush1.msra.mxu0 0.0
        %1662 = vmatprep.subr.mxu0 0.0
        %1663 = vmatpush1.msra.mxu0 0.0
        %1664 = vmatprep.subr.mxu0 0.0
        %1665 = vmatpush1.msra.mxu0 0.0
        %1666 = vmatprep.subr.mxu0 0.0
        %1667 = vmatpush1.msra.mxu0 0.0
        %1668 = vmatprep.mubr.f32.mxu0 0.0
        %1669 = vmatmul.mubr.f32.gmra.mrb[0].mxu0 %v1505
        %v1670 = vpop.f32.mrb[0].mxu0
        %v1671 = vadd.f32 %v1501, %v1670
        %v1672 = vpop.f32.mrb[0].mxu0
        %1673 = vmatprep.mubr.f32.mxu0 0.0
        %1674 = vmatmul.mubr.f32.gmra.mrb[0].mxu0 %v1508
        %v1675 = vpop.f32.mrb[0].mxu0
        %v1676 = vadd.f32 %v1501, %v1675
        %v1677 = vpop.f32.mrb[0].mxu0
        %1678 = vmatprep.mubr.f32.mxu0 0.0
        %1679 = vmatmul.mubr.f32.gmra.mrb[0].mxu0 %v1511
        %v1680 = vpop.f32.mrb[0].mxu0
        %v1681 = vadd.f32 %v1501, %v1680
        %v1682 = vpop.f32.mrb[0].mxu0
        %1683 = vmatprep.mubr.f32.mxu0 0.0
        %1684 = vmatmul.mubr.f32.gmra.mrb[0].mxu0 %v1514
        %v1685 = vpop.f32.mrb[0].mxu0
        %v1686 = vadd.f32 %v1501, %v1685
        %v1687 = vpop.f32.mrb[0].mxu0
        %1688 = vmatprep.mubr.f32.mxu0 0.0
        %1689 = vmatmul.mubr.f32.gmra.mrb[0].mxu0 %v1517
        %v1690 = vpop.f32.mrb[0].mxu0
        %v1691 = vadd.f32 %v1501, %v1690
        %v1692 = vpop.f32.mrb[0].mxu0
        %1693 = vmatprep.mubr.f32.mxu0 0.0
        %1694 = vmatmul.mubr.f32.gmra.mrb[0].mxu0 %v1520
        %v1695 = vpop.f32.mrb[0].mxu0
        %v1696 = vadd.f32 %v1501, %v1695
        %v1697 = vpop.f32.mrb[0].mxu0
        %1698 = vmatprep.mubr.f32.mxu0 0.0
        %1699 = vmatmul.mubr.f32.gmra.mrb[0].mxu0 %v1523
        %v1700 = vpop.f32.mrb[0].mxu0
        %v1701 = vadd.f32 %v1501, %v1700
        %v1702 = vpop.f32.mrb[0].mxu0
        %1703 = vmatprep.mubr.f32.mxu0 0.0
        %1704 = vmatmul.mubr.f32.gmra.mrb[0].mxu0 %v1526
        %v1705 = vpop.f32.mrb[0].mxu0
        %v1706 = vadd.f32 %v1501, %v1705
        %v1707 = vpop.f32.mrb[0].mxu0
        %1708 = vmatprep.mubr.f32.mxu0 0.0
        %1709 = vmatmul.mubr.f32.gmra.mrb[0].mxu0 %v1529
        %v1710 = vpop.f32.mrb[0].mxu0
        %v1711 = vadd.f32 %v1501, %v1710
        %v1712 = vpop.f32.mrb[0].mxu0
        %1713 = vmatprep.mubr.f32.mxu0 0.0
        %1714 = vmatmul.mubr.f32.gmra.mrb[0].mxu0 %v1532
        %v1715 = vpop.f32.mrb[0].mxu0
        %v1716 = vadd.f32 %v1501, %v1715
        %v1717 = vpop.f32.mrb[0].mxu0
        %1718 = vmatprep.mubr.f32.mxu0 0.0
        %1719 = vmatmul.mubr.f32.gmra.mrb[0].mxu0 %v1535
        %v1720 = vpop.f32.mrb[0].mxu0
        %v1721 = vadd.f32 %v1501, %v1720
        %v1722 = vpop.f32.mrb[0].mxu0
        %1723 = vmatprep.mubr.f32.mxu0 0.0
        %1724 = vmatmul.mubr.f32.gmra.mrb[0].mxu0 %v1538
        %v1725 = vpop.f32.mrb[0].mxu0
        %v1726 = vadd.f32 %v1501, %v1725
        %v1727 = vpop.f32.mrb[0].mxu0
        %1728 = vmatprep.mubr.f32.mxu0 0.0
        %1729 = vmatmul.mubr.f32.gmra.mrb[0].mxu0 %v1541
        %v1730 = vpop.f32.mrb[0].mxu0
        %v1731 = vadd.f32 %v1501, %v1730
        %v1732 = vpop.f32.mrb[0].mxu0
        %1733 = vmatprep.mubr.f32.mxu0 0.0
        %1734 = vmatmul.mubr.f32.gmra.mrb[0].mxu0 %v1544
        %v1735 = vpop.f32.mrb[0].mxu0
        %v1736 = vadd.f32 %v1501, %v1735
        %v1737 = vpop.f32.mrb[0].mxu0
        %1738 = vmatprep.mubr.f32.mxu0 0.0
        %1739 = vmatmul.mubr.f32.gmra.mrb[0].mxu0 %v1547
        %v1740 = vpop.f32.mrb[0].mxu0
        %v1741 = vadd.f32 %v1501, %v1740
        %v1742 = vpop.f32.mrb[0].mxu0
        %1743 = vmatprep.mubr.f32.mxu0 0.0
        %1744 = vmatmul.mubr.f32.gmra.mrb[0].mxu0 %v1550
        %v1745 = vpop.f32.mrb[0].mxu0
        %v1746 = vadd.f32 %v1501, %v1745
        %v1747 = vpop.f32.mrb[0].mxu0
        %1748 = vmatprep.mubr.f32.mxu0 0.0
        %1749 = vmatmul.mubr.f32.gmra.mrb[0].mxu0 %v1553
        %v1750 = vpop.f32.mrb[0].mxu0
        %v1751 = vadd.f32 %v1501, %v1750
        %v1752 = vpop.f32.mrb[0].mxu0
        %1753 = vmatprep.mubr.f32.mxu0 0.0
        %1754 = vmatmul.mubr.f32.gmra.mrb[0].mxu0 %v1556
        %v1755 = vpop.f32.mrb[0].mxu0
        %v1756 = vadd.f32 %v1501, %v1755
        %v1757 = vpop.f32.mrb[0].mxu0
        %1758 = vmatprep.mubr.f32.mxu0 0.0
        %1759 = vmatmul.mubr.f32.gmra.mrb[0].mxu0 %v1559
        %v1760 = vpop.f32.mrb[0].mxu0
        %v1761 = vadd.f32 %v1501, %v1760
        %v1762 = vpop.f32.mrb[0].mxu0
        %1763 = vmatprep.mubr.f32.mxu0 0.0
        %1764 = vmatmul.mubr.f32.gmra.mrb[0].mxu0 %v1562
        %v1765 = vpop.f32.mrb[0].mxu0
        %v1766 = vadd.f32 %v1501, %v1765
        %v1767 = vpop.f32.mrb[0].mxu0
        %1768 = vmatprep.mubr.f32.mxu0 0.0
        %1769 = vmatmul.mubr.f32.gmra.mrb[0].mxu0 %v1565
        %v1770 = vpop.f32.mrb[0].mxu0
        %v1771 = vadd.f32 %v1501, %v1770
        %v1772 = vpop.f32.mrb[0].mxu0
        %1773 = vmatprep.mubr.f32.mxu0 0.0
        %1774 = vmatmul.mubr.f32.gmra.mrb[0].mxu0 %v1568
        %v1775 = vpop.f32.mrb[0].mxu0
        %v1776 = vadd.f32 %v1501, %v1775
        %v1777 = vpop.f32.mrb[0].mxu0
        %1778 = vmatprep.mubr.f32.mxu0 0.0
        %1779 = vmatmul.mubr.f32.gmra.mrb[0].mxu0 %v1571
        %v1780 = vpop.f32.mrb[0].mxu0
        %v1781 = vadd.f32 %v1501, %v1780
        %v1782 = vpop.f32.mrb[0].mxu0
        %1783 = vmatprep.mubr.f32.mxu0 0.0
        %1784 = vmatmul.mubr.f32.gmra.mrb[0].mxu0 %v1574
        %v1785 = vpop.f32.mrb[0].mxu0
        %v1786 = vadd.f32 %v1501, %v1785
        %v1787 = vpop.f32.mrb[0].mxu0
        %1788 = vmatprep.mubr.f32.mxu0 0.0
        %1789 = vmatmul.mubr.f32.gmra.mrb[0].mxu0 %v1577
        %v1790 = vpop.f32.mrb[0].mxu0
        %v1791 = vadd.f32 %v1501, %v1790
        %v1792 = vpop.f32.mrb[0].mxu0
        %1793 = vmatprep.mubr.f32.mxu0 0.0
        %1794 = vmatmul.mubr.f32.gmra.mrb[0].mxu0 %v1580
        %v1795 = vpop.f32.mrb[0].mxu0
        %v1796 = vadd.f32 %v1501, %v1795
        %v1797 = vpop.f32.mrb[0].mxu0
        %1798 = vmatprep.mubr.f32.mxu0 0.0
        %1799 = vmatmul.mubr.f32.gmra.mrb[0].mxu0 %v1583
        %v1800 = vpop.f32.mrb[0].mxu0
        %v1801 = vadd.f32 %v1501, %v1800
        %v1802 = vpop.f32.mrb[0].mxu0
        %1803 = vmatprep.mubr.f32.mxu0 0.0
        %1804 = vmatmul.mubr.f32.gmra.mrb[0].mxu0 %v1586
        %v1805 = vpop.f32.mrb[0].mxu0
        %v1806 = vadd.f32 %v1501, %v1805
        %v1807 = vpop.f32.mrb[0].mxu0
        %1808 = vmatprep.mubr.f32.mxu0 0.0
        %1809 = vmatmul.mubr.f32.gmra.mrb[0].mxu0 %v1589
        %v1810 = vpop.f32.mrb[0].mxu0
        %v1811 = vadd.f32 %v1501, %v1810
        %v1812 = vpop.f32.mrb[0].mxu0
        %1813 = vmatprep.mubr.f32.mxu0 0.0
        %1814 = vmatmul.mubr.f32.gmra.mrb[0].mxu0 %v1592
        %v1815 = vpop.f32.mrb[0].mxu0
        %v1816 = vadd.f32 %v1501, %v1815
        %v1817 = vpop.f32.mrb[0].mxu0
        %1818 = vmatprep.mubr.f32.mxu0 0.0
        %1819 = vmatmul.mubr.f32.gmra.mrb[0].mxu0 %v1595
        %v1820 = vpop.f32.mrb[0].mxu0
        %v1821 = vadd.f32 %v1501, %v1820
        %v1822 = vpop.f32.mrb[0].mxu0
        %1823 = vmatprep.mubr.f32.mxu0 0.0
        %1824 = vmatmul.mubr.f32.gmra.mrb[0].mxu0 %v1598
        %v1825 = vpop.f32.mrb[0].mxu0
        %v1826 = vadd.f32 %v1501, %v1825
        %v1827 = vpop.f32.mrb[0].mxu0
        %1828 = vdwg.mxu0
        %v1829 = vmax.f32 %v1671, 0.0
        %v1830 = vmax.f32 %v1676, 0.0
        %v1831 = vmax.f32 %v1681, 0.0
        %v1832 = vmax.f32 %v1686, 0.0
        %v1833 = vmax.f32 %v1691, 0.0
        %v1834 = vmax.f32 %v1696, 0.0
        %v1835 = vmax.f32 %v1701, 0.0
        %v1836 = vmax.f32 %v1706, 0.0
        %v1837 = vmax.f32 %v1711, 0.0
        %v1838 = vmax.f32 %v1716, 0.0
        %v1839 = vmax.f32 %v1721, 0.0
        %v1840 = vmax.f32 %v1726, 0.0
        %v1841 = vmax.f32 %v1731, 0.0
        %v1842 = vmax.f32 %v1736, 0.0
        %v1843 = vmax.f32 %v1741, 0.0
        %v1844 = vmax.f32 %v1746, 0.0
        %v1845 = vmax.f32 %v1751, 0.0
        %v1846 = vmax.f32 %v1756, 0.0
        %v1847 = vmax.f32 %v1761, 0.0
        %v1848 = vmax.f32 %v1766, 0.0
        %v1849 = vmax.f32 %v1771, 0.0
        %v1850 = vmax.f32 %v1776, 0.0
        %v1851 = vmax.f32 %v1781, 0.0
        %v1852 = vmax.f32 %v1786, 0.0
        %v1853 = vmax.f32 %v1791, 0.0
        %v1854 = vmax.f32 %v1796, 0.0
        %v1855 = vmax.f32 %v1801, 0.0
        %v1856 = vmax.f32 %v1806, 0.0
        %v1857 = vmax.f32 %v1811, 0.0
        %v1858 = vmax.f32 %v1816, 0.0
        %v1859 = vmax.f32 %v1821, 0.0
        %v1860 = vmax.f32 %v1826, 0.0
        %1861 = vst.msk [vmem:[%s163] sm:$0xff] %vm1326, %v1829
        %1862 = vst.msk [vmem:[%s163 + $0x8] sm:$0xff] %vm1326, %v1830
        %1863 = vst.msk [vmem:[%s163 + $0x10] sm:$0xff] %vm1326, %v1831
        %1864 = vst.msk [vmem:[%s163 + $0x18] sm:$0xff] %vm1326, %v1832
        %1865 = vst.msk [vmem:[%s163 + $0x20] sm:$0xff] %vm1326, %v1833
        %1866 = vst.msk [vmem:[%s163 + $0x28] sm:$0xff] %vm1326, %v1834
        %1867 = vst.msk [vmem:[%s163 + $0x30] sm:$0xff] %vm1326, %v1835
        %1868 = vst.msk [vmem:[%s163 + $0x38] sm:$0xff] %vm1326, %v1836
        %1869 = vst.msk [vmem:[%s163 + $0x40] sm:$0xff] %vm1326, %v1837
        %1870 = vst.msk [vmem:[%s163 + $0x48] sm:$0xff] %vm1326, %v1838
        %1871 = vst.msk [vmem:[%s163 + $0x50] sm:$0xff] %vm1326, %v1839
        %1872 = vst.msk [vmem:[%s163 + $0x58] sm:$0xff] %vm1326, %v1840
        %1873 = vst.msk [vmem:[%s163 + $0x60] sm:$0xff] %vm1326, %v1841
        %1874 = vst.msk [vmem:[%s163 + $0x68] sm:$0xff] %vm1326, %v1842
        %1875 = vst.msk [vmem:[%s163 + $0x70] sm:$0xff] %vm1326, %v1843
        %1876 = vst.msk [vmem:[%s163 + $0x78] sm:$0xff] %vm1326, %v1844
        %1877 = vst.msk [vmem:[%s163 + $0x80] sm:$0xff] %vm1326, %v1845
        %1878 = vst.msk [vmem:[%s163 + $0x88] sm:$0xff] %vm1326, %v1846
        %1879 = vst.msk [vmem:[%s163 + $0x90] sm:$0xff] %vm1326, %v1847
        %1880 = vst.msk [vmem:[%s163 + $0x98] sm:$0xff] %vm1326, %v1848
        %1881 = vst.msk [vmem:[%s163 + $0xa0] sm:$0xff] %vm1326, %v1849
        %1882 = vst.msk [vmem:[%s163 + $0xa8] sm:$0xff] %vm1326, %v1850
        %1883 = vst.msk [vmem:[%s163 + $0xb0] sm:$0xff] %vm1326, %v1851
        %1884 = vst.msk [vmem:[%s163 + $0xb8] sm:$0xff] %vm1326, %v1852
        %1885 = vst.msk [vmem:[%s163 + $0xc0] sm:$0xff] %vm1326, %v1853
        %1886 = vst.msk [vmem:[%s163 + $0xc8] sm:$0xff] %vm1326, %v1854
        %1887 = vst.msk [vmem:[%s163 + $0xd0] sm:$0xff] %vm1326, %v1855
        %1888 = vst.msk [vmem:[%s163 + $0xd8] sm:$0xff] %vm1326, %v1856
        %1889 = vst.msk [vmem:[%s163 + $0xe0] sm:$0xff] %vm1326, %v1857
        %1890 = vst.msk [vmem:[%s163 + $0xe8] sm:$0xff] %vm1326, %v1858
        %1891 = vst.msk [vmem:[%s163 + $0xf0] sm:$0xff] %vm1326, %v1859
        %1892 = vst.msk [vmem:[%s163 + $0xf8] sm:$0xff] %vm1326, %v1860
        %s1893 = sand.u32 %s93, 1
        %s1894 = scalar_lea.sflag [#allocation3], %s1893
        %s1895 = sand.u32 %s93, 1
        %s1896 = smul.addr %s1895, 256
        %s1897 = scalar_lea.vmem [#allocation2], %s1896
        // Predicated region
        $region33: #{tpu_custom_call.1} parent=31 // pred_check
          %p1898 = pneg %p103
        $region34: #{tpu_custom_call.1} parent=31 // pred_check_branch
          %1900 = sbr.rel (%p1898) target = $region36
        $region35: #{tpu_custom_call.1} parent=31 // pred_region
          %s1902 = ssub.s32 4096, 4096
          %1903 = vsyncadd %s1894, %s1902
          %s1904 = smul.addr %s17, 32
          %s1905 = smul.addr %s1904, 128
          %s1906 = scalar_lea.hbm %s3, %s1905
          %s1907 = sshll.u32 %s1897, 4
          %s1908 = int_to_ptr.vmem [resolvable:$true] %s1907
          %1913 = dma.vmem_to_hbm [thread:$0]  %s1908, 4096, %s1906, %s1894, 128, 128, 8
        $region36: #{tpu_custom_call.1} parent=31 // pred_fallthru
          _
      $region32: #{tpu_custom_call.1} parent=5 // pred_fallthru
        _
      %p1914 = scmp.le.s32.totalorder 2, %s12
      // Predicated region
      $region37: #{tpu_custom_call.1} parent=5 // pred_check
        %p1915 = pneg %p1914
      $region38: #{tpu_custom_call.1} parent=5 // pred_check_branch
        %1917 = sbr.rel (%p1915) target = $region40
      $region39: #{tpu_custom_call.1} parent=5 // pred_region
        %s1918 = ssub.s32 %s12, 2
        // Predicated region
        $region41: #{tpu_custom_call.1} parent=39 // pred_check
          %p1919 = pneg %p109
        $region42: #{tpu_custom_call.1} parent=39 // pred_check_branch
          %1921 = sbr.rel (%p1919) target = $region44
        $region43: #{tpu_custom_call.1} parent=39 // pred_region
          %s1922 = sand.u32 %s94, 1
          %s1923 = scalar_lea.sflag [#allocation3], %s1922
          %s1924 = sand.u32 %s94, 1
          %s1925 = smul.addr %s1924, 256
          %s1926 = scalar_lea.vmem [#allocation2], %s1925
          %1927 = dma.done %s1923, 4096
        $region44: #{tpu_custom_call.1} parent=39 // pred_fallthru
          _
      $region40: #{tpu_custom_call.1} parent=5 // pred_fallthru
        _
    $region6: #{tpu_custom_call.1} parent=1 // loop_footer
      %s16 = sadd.s32 1, %s12
    $region7: #{tpu_custom_call.1} parent=1 // loop_footer_branch
      %11 = sbr.rel target = $region3
    $region8: #{tpu_custom_call.1} parent=1 // loop_exit
      _
    %1928 = vsyncpa [#allocation3], 1
    %s1929 = scalar_lea.sflag [#allocation3], 1
    %1930 = vsyncpa %s1929, 1

</llo_original>
